<compile_context>
chip_gen: v6e
topology: v6e:2x2x1
jax: 0.10.0
libtpu: 0.0.40
codegen_flags: <defaults>
</compile_context>

<pallas_src>
import functools

import jax
import jax.numpy as jnp
from jax.experimental import pallas as pl
from jax.experimental.pallas import tpu as pltpu

EPS = 1e-5  # nn.BatchNorm2d default eps


# ----------------------------------------------------------------------------
# Kernel 1: dilated (atrous) convolution, stride=1, no bias, + fused per-sample
# BN statistic partials (sum, sumsq over H*W).
# One grid step per batch element.  The KHxKW taps are gathered once into an
# im2col matrix and contracted with a single bf16 MXU matmul (f32 accumulate).
# TODO(synk): for production ASPP shapes (e.g. 65x65x2048) tile the grid over
#             spatial rows / Cout and set vmem_limit_bytes; the per-sample
#             whole-image block here is sized for the small demo.
# ----------------------------------------------------------------------------
def _make_conv_kernel(H, W, KH, KW, dil, Cin, Cout):
    def kernel(xp_ref, w_ref, o_ref, s_ref, sq_ref):
        xp = xp_ref[0]              # (Hp, Wp, Cin) bf16 padded slab (this sample)
        w = w_ref[...]              # (KH*KW*Cin, Cout) bf16

        # im2col: gather the KH*KW shifted views once, concatenate along lanes.
        cols = []
        for kh in range(KH):
            for kw in range(KW):
                patch = jax.lax.slice(
                    xp, (kh * dil, kw * dil, 0), (kh * dil + H, kw * dil + W, Cin)
                )
                cols.append(patch.reshape(H * W, Cin))
        pmat = jnp.concatenate(cols, axis=-1)            # (H*W, KH*KW*Cin) bf16

        # single MXU matmul, f32 accumulation
        acc = jnp.dot(pmat, w, preferred_element_type=jnp.float32)  # (H*W, Cout)

        o_ref[0] = acc.reshape(H, W, Cout)
        # fused BN statistic partials for this sample
        s_ref[...] = jnp.sum(acc, axis=0, keepdims=True).reshape(1, 1, Cout)
        sq_ref[...] = jnp.sum(acc * acc, axis=0, keepdims=True).reshape(1, 1, Cout)

    return kernel


# ----------------------------------------------------------------------------
# Kernel 2: BN apply + ReLU.  scale/shift are pre-folded per channel and tiled
# across W so the lane axis is dense (W*Cout wide); per element it is a single
# multiply-add followed by max.
# ----------------------------------------------------------------------------
def _bn_apply_kernel(y_ref, scale_ref, shift_ref, o_ref):
    o_ref[...] = jnp.maximum(y_ref[...] * scale_ref[...] + shift_ref[...], 0.0)


# ----------------------------------------------------------------------------
# Wrapper: NCHW in -> NCHW out, like the PyTorch module.
# ----------------------------------------------------------------------------
@functools.partial(jax.jit, static_argnames=("padding", "dilation"))
def aspp_module_forward(x_nchw, weight, gamma, beta, *, padding, dilation):
    N, Cin, H, W = x_nchw.shape
    KH, KW, _, Cout = weight.shape

    # glue: NCHW -> NHWC, bf16 cast for the MXU, spatial zero-pad.
    # (XLA fuses the transpose + cast + pad into one HBM pass.)
    x = jnp.transpose(x_nchw, (0, 2, 3, 1)).astype(jnp.bfloat16)
    xp = jnp.pad(x, ((0, 0), (padding, padding), (padding, padding), (0, 0)))
    Hp, Wp = H + 2 * padding, W + 2 * padding

    # weight in im2col layout: (KH*KW*Cin, Cout), bf16
    w2d = weight.astype(jnp.bfloat16).reshape(KH * KW * Cin, Cout)

    conv_out, part_sum, part_sq = pl.pallas_call(
        _make_conv_kernel(H, W, KH, KW, dilation, Cin, Cout),
        out_shape=(
            jax.ShapeDtypeStruct((N, H, W, Cout), jnp.float32),
            jax.ShapeDtypeStruct((N, 1, Cout), jnp.float32),
            jax.ShapeDtypeStruct((N, 1, Cout), jnp.float32),
        ),
        grid=(N,),
        in_specs=[
            pl.BlockSpec((1, Hp, Wp, Cin), lambda n: (n, 0, 0, 0)),
            pl.BlockSpec((KH * KW * Cin, Cout), lambda n: (0, 0)),
        ],
        out_specs=[
            pl.BlockSpec((1, H, W, Cout), lambda n: (n, 0, 0, 0)),
            pl.BlockSpec((1, 1, Cout), lambda n: (n, 0, 0)),
            pl.BlockSpec((1, 1, Cout), lambda n: (n, 0, 0)),
        ],
        compiler_params=pltpu.CompilerParams(dimension_semantics=("parallel",)),
    )(xp, w2d)

    # BN batch statistics (training-mode, biased variance) from the fused
    # per-sample partials: tiny (Cout,)-sized math, folded into scale/shift.
    count = jnp.float32(N * H * W)
    mean = jnp.sum(part_sum, axis=(0, 1)) / count
    var = jnp.sum(part_sq, axis=(0, 1)) / count - mean * mean
    scale = gamma * jax.lax.rsqrt(var + EPS)          # (Cout,)
    shift = beta - mean * scale                       # (Cout,)

    # Apply pass: fold W into the lane axis -> lane width = W*Cout (dense,
    # 128 for the demo), tiled over the N*H row axis.
    lane = W * Cout
    y2d = conv_out.reshape(N * H, lane)
    scale_l = jnp.tile(scale.reshape(1, Cout), (1, W))   # (1, W*Cout)
    shift_l = jnp.tile(shift.reshape(1, Cout), (1, W))

    rows = N * H
    row_tile = rows
    for cand in (1024, 512, 256, 128, 64, 32, 16, 8):
        if rows % cand == 0:
            row_tile = cand
            break

    out2d = pl.pallas_call(
        _bn_apply_kernel,
        out_shape=jax.ShapeDtypeStruct((rows, lane), jnp.float32),
        grid=(rows // row_tile,),
        in_specs=[
            pl.BlockSpec((row_tile, lane), lambda i: (i, 0)),
            pl.BlockSpec((1, lane), lambda i: (0, 0)),
            pl.BlockSpec((1, lane), lambda i: (0, 0)),
        ],
        out_specs=pl.BlockSpec((row_tile, lane), lambda i: (i, 0)),
        compiler_params=pltpu.CompilerParams(dimension_semantics=("parallel",)),
    )(y2d, scale_l, shift_l)

    # glue: NHWC -> NCHW
    return jnp.transpose(out2d.reshape(N, H, W, Cout), (0, 3, 1, 2))


# ----------------------------------------------------------------------------
# Pure-JAX reference (correctness check only; f32 conv).
# ----------------------------------------------------------------------------
def _reference(x_nchw, weight, gamma, beta, padding, dilation):
    x = jnp.transpose(x_nchw, (0, 2, 3, 1)).astype(jnp.float32)
    y = jax.lax.conv_general_dilated(
        x, weight,
        window_strides=(1, 1),
        padding=[(padding, padding), (padding, padding)],
        rhs_dilation=(dilation, dilation),
        dimension_numbers=("NHWC", "HWIO", "NHWC"),
    )
    mean = jnp.mean(y, axis=(0, 1, 2), keepdims=True)
    var = jnp.mean(jnp.square(y - mean), axis=(0, 1, 2), keepdims=True)
    out = jnp.maximum((y - mean) * jax.lax.rsqrt(var + EPS) * gamma + beta, 0.0)
    return jnp.transpose(out, (0, 3, 1, 2))


if __name__ == "__main__":
    # Module hyper-params (typical ASPP branch: 3x3, padding == dilation).
    N, Cin, H, W = 2, 4, 16, 16
    Cout, K, dilation, padding = 8, 3, 2, 2

    key = jax.random.PRNGKey(0)
    kx, kw = jax.random.split(key)

    # Deterministic inputs / params.
    x = jax.random.normal(kx, (N, Cin, H, W), dtype=jnp.float32)
    # kaiming_normal_ (fan_in, gain=sqrt(2)) on the conv weight, stored in
    # HWIO layout for the NHWC kernels.
    fan_in = Cin * K * K
    weight = jax.random.normal(kw, (K, K, Cin, Cout), dtype=jnp.float32) * jnp.sqrt(
        2.0 / fan_in
    )
    gamma = jnp.ones((Cout,), jnp.float32)   # bn.weight.fill_(1)
    beta = jnp.zeros((Cout,), jnp.float32)   # bn.bias.zero_()

    out = aspp_module_forward(x, weight, gamma, beta, padding=padding, dilation=dilation)
    out = jax.block_until_ready(out)

    ref = _reference(x, weight, gamma, beta, padding, dilation)
    assert out.shape == (N, Cout, H, W)
    # bf16 MXU inputs (f32 accumulation) -> slightly looser tolerance than f32.
    assert jnp.max(jnp.abs(out - ref)) < 5e-2, "mismatch vs reference"

    print("KERNEL_OK")
</pallas_src>

<mosaic_0001>
module attributes {stable_mosaic.version = 11 : i64} {
  func.func @kernel(%arg0: i32, %arg1: memref<1x20x20x4xbf16, #tpu.memory_space<vmem>>, %arg2: memref<36x8xbf16, #tpu.memory_space<vmem>>, %arg3: memref<1x16x16x8xf32, #tpu.memory_space<vmem>>, %arg4: memref<1x1x8xf32, #tpu.memory_space<vmem>>, %arg5: memref<1x1x8xf32, #tpu.memory_space<vmem>>) attributes {dimension_semantics = [#tpu.dimension_semantics<parallel>], iteration_bounds = array<i64: 2>, scalar_prefetch = 0 : i64, scratch_operands = 0 : i64, tpu.core_type = #tpu.core_type<tc>, window_params = [{transform_indices = @transform_0, window_bounds = array<i64: 1, 20, 20, 4>}, {pipeline_mode = #tpu.pipeline_mode<synchronous>, transform_indices = @transform_1, window_bounds = array<i64: 36, 8>}, {transform_indices = @transform_2, window_bounds = array<i64: 1, 16, 16, 8>}, {transform_indices = @transform_3, window_bounds = array<i64: 1, 1, 8>}, {transform_indices = @transform_4, window_bounds = array<i64: 1, 1, 8>}]} {
    %c0 = arith.constant 0 : index
    %c0_0 = arith.constant 0 : index
    %c0_1 = arith.constant 0 : index
    %c0_2 = arith.constant 0 : index
    %0 = vector.load %arg1[%c0, %c0_0, %c0_1, %c0_2] : memref<1x20x20x4xbf16, #tpu.memory_space<vmem>>, vector<1x20x20x4xbf16>
    %1 = vector.shape_cast %0 : vector<1x20x20x4xbf16> to vector<20x20x4xbf16>
    %c0_3 = arith.constant 0 : index
    %c0_4 = arith.constant 0 : index
    %2 = vector.load %arg2[%c0_3, %c0_4] : memref<36x8xbf16, #tpu.memory_space<vmem>>, vector<36x8xbf16>
    %3 = vector.extract_strided_slice %1 {offsets = [0, 0, 0], sizes = [16, 16, 4], strides = [1, 1, 1]} : vector<20x20x4xbf16> to vector<16x16x4xbf16>
    %4 = vector.shape_cast %3 : vector<16x16x4xbf16> to vector<256x4xbf16>
    %5 = vector.extract_strided_slice %1 {offsets = [0, 2, 0], sizes = [16, 16, 4], strides = [1, 1, 1]} : vector<20x20x4xbf16> to vector<16x16x4xbf16>
    %6 = vector.shape_cast %5 : vector<16x16x4xbf16> to vector<256x4xbf16>
    %7 = vector.extract_strided_slice %1 {offsets = [0, 4, 0], sizes = [16, 16, 4], strides = [1, 1, 1]} : vector<20x20x4xbf16> to vector<16x16x4xbf16>
    %8 = vector.shape_cast %7 : vector<16x16x4xbf16> to vector<256x4xbf16>
    %9 = vector.extract_strided_slice %1 {offsets = [2, 0, 0], sizes = [16, 16, 4], strides = [1, 1, 1]} : vector<20x20x4xbf16> to vector<16x16x4xbf16>
    %10 = vector.shape_cast %9 : vector<16x16x4xbf16> to vector<256x4xbf16>
    %11 = vector.extract_strided_slice %1 {offsets = [2, 2, 0], sizes = [16, 16, 4], strides = [1, 1, 1]} : vector<20x20x4xbf16> to vector<16x16x4xbf16>
    %12 = vector.shape_cast %11 : vector<16x16x4xbf16> to vector<256x4xbf16>
    %13 = vector.extract_strided_slice %1 {offsets = [2, 4, 0], sizes = [16, 16, 4], strides = [1, 1, 1]} : vector<20x20x4xbf16> to vector<16x16x4xbf16>
    %14 = vector.shape_cast %13 : vector<16x16x4xbf16> to vector<256x4xbf16>
    %15 = vector.extract_strided_slice %1 {offsets = [4, 0, 0], sizes = [16, 16, 4], strides = [1, 1, 1]} : vector<20x20x4xbf16> to vector<16x16x4xbf16>
    %16 = vector.shape_cast %15 : vector<16x16x4xbf16> to vector<256x4xbf16>
    %17 = vector.extract_strided_slice %1 {offsets = [4, 2, 0], sizes = [16, 16, 4], strides = [1, 1, 1]} : vector<20x20x4xbf16> to vector<16x16x4xbf16>
    %18 = vector.shape_cast %17 : vector<16x16x4xbf16> to vector<256x4xbf16>
    %19 = vector.extract_strided_slice %1 {offsets = [4, 4, 0], sizes = [16, 16, 4], strides = [1, 1, 1]} : vector<20x20x4xbf16> to vector<16x16x4xbf16>
    %20 = vector.shape_cast %19 : vector<16x16x4xbf16> to vector<256x4xbf16>
    %21 = tpu.concatenate %4, %6, %8, %10, %12, %14, %16, %18, %20 in 1 : vector<256x4xbf16>, vector<256x4xbf16>, vector<256x4xbf16>, vector<256x4xbf16>, vector<256x4xbf16>, vector<256x4xbf16>, vector<256x4xbf16>, vector<256x4xbf16>, vector<256x4xbf16> -> vector<256x36xbf16>
    %cst = arith.constant dense<0.000000e+00> : vector<256x8xf32>
    %22 = tpu.matmul %21, %2, %cst {dimension_numbers = #tpu.dot_dimension_numbers<[1], [0], [0], [1], [0, 0, 1, 1], [], []>} : vector<256x36xbf16>, vector<36x8xbf16>, vector<256x8xf32> -> vector<256x8xf32>
    %23 = vector.shape_cast %22 : vector<256x8xf32> to vector<16x16x8xf32>
    %c0_5 = arith.constant 0 : index
    %c0_6 = arith.constant 0 : index
    %c0_7 = arith.constant 0 : index
    %c0_8 = arith.constant 0 : index
    %24 = vector.load %arg3[%c0_5, %c0_6, %c0_7, %c0_8] : memref<1x16x16x8xf32, #tpu.memory_space<vmem>>, vector<1x16x16x8xf32>
    %25 = vector.shape_cast %24 : vector<1x16x16x8xf32> to vector<16x16x8xf32>
    %26 = vector.shape_cast %23 : vector<16x16x8xf32> to vector<1x16x16x8xf32>
    tpu.vector_store %arg3[%c0_5, %c0_6, %c0_7, %c0_8], %26 {strides = array<i32>} : memref<1x16x16x8xf32, #tpu.memory_space<vmem>>, vector<1x16x16x8xf32>,
    %cst_9 = arith.constant dense<0.000000e+00> : vector<8xf32>
    %27 = vector.multi_reduction <add>, %22, %cst_9 [0] : vector<256x8xf32> to vector<8xf32>
    %28 = vector.shape_cast %27 : vector<8xf32> to vector<1x8xf32>
    %29 = vector.shape_cast %28 : vector<1x8xf32> to vector<1x1x8xf32>
    %c0_10 = arith.constant 0 : index
    %c0_11 = arith.constant 0 : index
    %c0_12 = arith.constant 0 : index
    %30 = vector.load %arg4[%c0_10, %c0_11, %c0_12] : memref<1x1x8xf32, #tpu.memory_space<vmem>>, vector<1x1x8xf32>
    tpu.vector_store %arg4[%c0_10, %c0_11, %c0_12], %29 {strides = array<i32>} : memref<1x1x8xf32, #tpu.memory_space<vmem>>, vector<1x1x8xf32>,
    %31 = arith.mulf %22, %22 : vector<256x8xf32>
    %cst_13 = arith.constant dense<0.000000e+00> : vector<8xf32>
    %32 = vector.multi_reduction <add>, %31, %cst_13 [0] : vector<256x8xf32> to vector<8xf32>
    %33 = vector.shape_cast %32 : vector<8xf32> to vector<1x8xf32>
    %34 = vector.shape_cast %33 : vector<1x8xf32> to vector<1x1x8xf32>
    %c0_14 = arith.constant 0 : index
    %c0_15 = arith.constant 0 : index
    %c0_16 = arith.constant 0 : index
    %35 = vector.load %arg5[%c0_14, %c0_15, %c0_16] : memref<1x1x8xf32, #tpu.memory_space<vmem>>, vector<1x1x8xf32>
    tpu.vector_store %arg5[%c0_14, %c0_15, %c0_16], %34 {strides = array<i32>} : memref<1x1x8xf32, #tpu.memory_space<vmem>>, vector<1x1x8xf32>,
    return
  }
  func.func @transform_0(%arg0: i32) -> (i32, i32, i32, i32) {
    %c0_i32 = arith.constant 0 : i32
    %c0_i32_0 = arith.constant 0 : i32
    %c0_i32_1 = arith.constant 0 : i32
    %c0_i32_2 = arith.constant 0 : i32
    return %arg0, %c0_i32, %c0_i32_0, %c0_i32_1 : i32, i32, i32, i32
  }
  func.func @transform_1(%arg0: i32) -> (i32, i32) {
    %c0_i32 = arith.constant 0 : i32
    %c0_i32_0 = arith.constant 0 : i32
    %c0_i32_1 = arith.constant 0 : i32
    return %c0_i32, %c0_i32_0 : i32, i32
  }
  func.func @transform_2(%arg0: i32) -> (i32, i32, i32, i32) {
    %c0_i32 = arith.constant 0 : i32
    %c0_i32_0 = arith.constant 0 : i32
    %c0_i32_1 = arith.constant 0 : i32
    %c0_i32_2 = arith.constant 0 : i32
    return %arg0, %c0_i32, %c0_i32_0, %c0_i32_1 : i32, i32, i32, i32
  }
  func.func @transform_3(%arg0: i32) -> (i32, i32, i32) {
    %c0_i32 = arith.constant 0 : i32
    %c0_i32_0 = arith.constant 0 : i32
    %c0_i32_1 = arith.constant 0 : i32
    return %arg0, %c0_i32, %c0_i32_0 : i32, i32, i32
  }
  func.func @transform_4(%arg0: i32) -> (i32, i32, i32) {
    %c0_i32 = arith.constant 0 : i32
    %c0_i32_0 = arith.constant 0 : i32
    %c0_i32_1 = arith.constant 0 : i32
    return %arg0, %c0_i32, %c0_i32_0 : i32, i32, i32
  }
}

module attributes {stable_mosaic.version = 11 : i64} {
  func.func @_bn_apply_kernel(%arg0: i32, %arg1: memref<32x128xf32, #tpu.memory_space<vmem>>, %arg2: memref<1x128xf32, #tpu.memory_space<vmem>>, %arg3: memref<1x128xf32, #tpu.memory_space<vmem>>, %arg4: memref<32x128xf32, #tpu.memory_space<vmem>>) attributes {dimension_semantics = [#tpu.dimension_semantics<parallel>], iteration_bounds = array<i64: 1>, scalar_prefetch = 0 : i64, scratch_operands = 0 : i64, tpu.core_type = #tpu.core_type<tc>, window_params = [{transform_indices = @transform_0, window_bounds = array<i64: 32, 128>}, {pipeline_mode = #tpu.pipeline_mode<synchronous>, transform_indices = @transform_1, window_bounds = array<i64: 1, 128>}, {pipeline_mode = #tpu.pipeline_mode<synchronous>, transform_indices = @transform_2, window_bounds = array<i64: 1, 128>}, {transform_indices = @transform_3, window_bounds = array<i64: 32, 128>}]} {
    %c0 = arith.constant 0 : index
    %c0_0 = arith.constant 0 : index
    %0 = vector.load %arg1[%c0, %c0_0] : memref<32x128xf32, #tpu.memory_space<vmem>>, vector<32x128xf32>
    %c0_1 = arith.constant 0 : index
    %c0_2 = arith.constant 0 : index
    %1 = vector.load %arg2[%c0_1, %c0_2] : memref<1x128xf32, #tpu.memory_space<vmem>>, vector<1x128xf32>
    %2 = vector.broadcast %1 : vector<1x128xf32> to vector<32x128xf32>
    %3 = arith.mulf %0, %2 : vector<32x128xf32>
    %c0_3 = arith.constant 0 : index
    %c0_4 = arith.constant 0 : index
    %4 = vector.load %arg3[%c0_3, %c0_4] : memref<1x128xf32, #tpu.memory_space<vmem>>, vector<1x128xf32>
    %5 = vector.broadcast %4 : vector<1x128xf32> to vector<32x128xf32>
    %6 = arith.addf %3, %5 : vector<32x128xf32>
    %cst = arith.constant 0.000000e+00 : f32
    %7 = vector.broadcast %cst : f32 to vector<32x128xf32>
    %8 = arith.maximumf %6, %7 : vector<32x128xf32>
    %c0_5 = arith.constant 0 : index
    %c0_6 = arith.constant 0 : index
    %9 = vector.load %arg4[%c0_5, %c0_6] : memref<32x128xf32, #tpu.memory_space<vmem>>, vector<32x128xf32>
    tpu.vector_store %arg4[%c0_5, %c0_6], %8 {strides = array<i32>} : memref<32x128xf32, #tpu.memory_space<vmem>>, vector<32x128xf32>,
    return
  }
  func.func @transform_0(%arg0: i32) -> (i32, i32) {
    %c0_i32 = arith.constant 0 : i32
    %c0_i32_0 = arith.constant 0 : i32
    return %arg0, %c0_i32 : i32, i32
  }
  func.func @transform_1(%arg0: i32) -> (i32, i32) {
    %c0_i32 = arith.constant 0 : i32
    %c0_i32_0 = arith.constant 0 : i32
    %c0_i32_1 = arith.constant 0 : i32
    return %c0_i32, %c0_i32_0 : i32, i32
  }
  func.func @transform_2(%arg0: i32) -> (i32, i32) {
    %c0_i32 = arith.constant 0 : i32
    %c0_i32_0 = arith.constant 0 : i32
    %c0_i32_1 = arith.constant 0 : i32
    return %c0_i32, %c0_i32_0 : i32, i32
  }
  func.func @transform_3(%arg0: i32) -> (i32, i32) {
    %c0_i32 = arith.constant 0 : i32
    %c0_i32_0 = arith.constant 0 : i32
    return %arg0, %c0_i32 : i32, i32
  }
}

</mosaic_0001>

<llo_original>
// kernel: aspp_module_forward.3
$region0: #{aspp_module_forward.3}
  #allocation0 [shape = 'u32[]', space=smem, size = 0x4, offset = 0x4, fixed_abs, tag = 'smem constant byte address 0x4 - core index']
  #allocation1 [shape = 'u32[144,128]{1,0:T(1,128)}', space=vmem, size = 0x12000, scoped, tag = 'internal scratch']
  %s0 = inlined_call_operand.vmem [shape: f32[32,128], index: 0, kind: input, shape index: {}]
  %s1 = inlined_call_operand.vmem [shape: f32[1,128], index: 1, kind: input, shape index: {}]
  %s2 = inlined_call_operand.vmem [shape: f32[1,128], index: 2, kind: input, shape index: {}]
  %s3 = inlined_call_operand.vmem [shape: f32[32,128], index: 3, kind: output, shape index: {}]
  %s4 = sld [smem:[#allocation0]]
  $region22: #{aspp_module_forward.3} parent=0
    _
  %s6 = ssub.s32 1, %s4
  %s7 = scalar_select 0, %s6, %s4
  // Predicated region
  $region2: #{aspp_module_forward.3} parent=0 // pred_check
    _
  $region3: #{aspp_module_forward.3} parent=0 // pred_check_branch
    %9 = sbr.rel (0) target = $region5
  $region4: #{aspp_module_forward.3} parent=0 // pred_region
    _
  $region5: #{aspp_module_forward.3} parent=0 // pred_fallthru
    _
  // Predicated region
  $region6: #{aspp_module_forward.3} parent=0 // pred_check
    _
  $region7: #{aspp_module_forward.3} parent=0 // pred_check_branch
    %11 = sbr.rel (0) target = $region9
  $region8: #{aspp_module_forward.3} parent=0 // pred_region
    _
  $region9: #{aspp_module_forward.3} parent=0 // pred_fallthru
    _
  // Predicated region
  $region10: #{aspp_module_forward.3} parent=0 // pred_check
    _
  $region11: #{aspp_module_forward.3} parent=0 // pred_check_branch
    %13 = sbr.rel (0) target = $region13
  $region12: #{aspp_module_forward.3} parent=0 // pred_region
    _
  $region13: #{aspp_module_forward.3} parent=0 // pred_fallthru
    _
  %v14 = vld [vmem:[%s0] sm:$0xff]
  %v15 = vld [vmem:[%s0 + $0x8] sm:$0xff]
  %v16 = vld [vmem:[%s0 + $0x10] sm:$0xff]
  %v17 = vld [vmem:[%s0 + $0x18] sm:$0xff]
  %v18 = vld [vmem:[%s1] sm:$0x1]
  %v20 = vlaneseq
  %v21 = vshrl.u32 %v20, 7
  %v22 = vsub.s32 0, %v21
  %v23 = vrot.slane %v18, %v22
  %v25 = vmul.f32 %v14, %v23
  %v26 = vmul.f32 %v15, %v23
  %v27 = vmul.f32 %v16, %v23
  %v28 = vmul.f32 %v17, %v23
  %v29 = vld [vmem:[%s2] sm:$0x1]
  %v31 = vlaneseq
  %v32 = vshrl.u32 %v31, 7
  %v33 = vsub.s32 0, %v32
  %v34 = vrot.slane %v29, %v33
  %v36 = vadd.f32 %v25, %v34
  %v37 = vadd.f32 %v26, %v34
  %v38 = vadd.f32 %v27, %v34
  %v39 = vadd.f32 %v28, %v34
  %v40 = vmax.f32 %v36, 0.0
  %v41 = vmax.f32 %v37, 0.0
  %v42 = vmax.f32 %v38, 0.0
  %v43 = vmax.f32 %v39, 0.0
  %44 = vst [vmem:[%s3] sm:$0xff] %v40
  %45 = vst [vmem:[%s3 + $0x8] sm:$0xff] %v41
  %46 = vst [vmem:[%s3 + $0x10] sm:$0xff] %v42
  %47 = vst [vmem:[%s3 + $0x18] sm:$0xff] %v43
  // Predicated region
  $region14: #{aspp_module_forward.3} parent=0 // pred_check
    _
  $region15: #{aspp_module_forward.3} parent=0 // pred_check_branch
    %49 = sbr.rel (0) target = $region17
  $region16: #{aspp_module_forward.3} parent=0 // pred_region
    _
  $region17: #{aspp_module_forward.3} parent=0 // pred_fallthru
    _
  // Predicated region
  $region18: #{aspp_module_forward.3} parent=0 // pred_check
    _
  $region19: #{aspp_module_forward.3} parent=0 // pred_check_branch
    %51 = sbr.rel (0) target = $region21
  $region20: #{aspp_module_forward.3} parent=0 // pred_region
    _
  $region21: #{aspp_module_forward.3} parent=0 // pred_fallthru
    _

// kernel: aspp_module_forward.2
$region0: #{aspp_module_forward.2}
  #allocation0 [shape = 'u32[]', space=smem, size = 0x4, offset = 0x4, fixed_abs, tag = 'smem constant byte address 0x4 - core index']
  #allocation1 [shape = 'u32[144,128]{1,0:T(1,128)}', space=vmem, size = 0x12000, scoped, tag = 'internal scratch']
  %s0 = inlined_call_operand.vmem [shape: bf16[2,20,20,4], index: 0, kind: input, shape index: {}]
  %s1 = inlined_call_operand.vmem [shape: bf16[36,8], index: 1, kind: input, shape index: {}]
  %s2 = inlined_call_operand.vmem [shape: f32[2,16,16,8], index: 2, kind: output, shape index: {0}]
  %s3 = inlined_call_operand.vmem [shape: f32[2,1,8], index: 3, kind: output, shape index: {1}]
  %s4 = inlined_call_operand.vmem [shape: f32[2,1,8], index: 4, kind: output, shape index: {2}]
  %5 = xla_tuple %s2, %s3, %s4
  %s6 = sld [smem:[#allocation0]]
  $region57: #{aspp_module_forward.2} parent=0
    _
  %s8 = ssub.s32 1, %s6
  %s9 = scalar_select 0, %s8, %s6
  loop: start=0, step=1, limit=4
  $region2: #{aspp_module_forward.2} parent=0 // loop_pre_header
    _
  $region3: #{aspp_module_forward.2} parent=0 // loop_header
    %s11 = sphi 0, %s15
    %p12 = scmp.ge.s32.totalorder %s11, 4
    %s21 = sphi 0, %s23
    %s24 = sphi 0, %s21
    %s25 = sphi 0, %s24
    %s41 = sphi 0, %s25
    %s45 = sphi 0, %s45
    %s47 = sphi 0, %s45
    %s48 = sphi 0, %s47
    %s62 = sphi 0, %s48
    %s68 = sphi 0, %s70
    %s71 = sphi 0, %s68
    %s72 = sphi 0, %s71
    %s88 = sphi 0, %s72
    %s94 = sphi 0, %s96
    %s97 = sphi 0, %s94
    %s98 = sphi 0, %s97
    %s114 = sphi 0, %s98
    %s120 = sphi 0, %s122
    %s123 = sphi 0, %s120
    %s124 = sphi 0, %s123
    %s140 = sphi 0, %s124
  $region4: #{aspp_module_forward.2} parent=0 // loop_header_branch
    %14 = sbr.rel (%p12) target = $region8
  $region5: #{aspp_module_forward.2} parent=0 // loop_body
    %s16 = ssub.s32 %s11, 1
    %s17 = ssub.s32 %s11, 2
    %s18 = sadd.s32 %s11, 1
    %s19 = ssub.s32 %s11, %s18
    %p20 = scmp.eq.s32.totalorder %s19, 0
    %s22 = sadd.s32 %s21, 1
    %s23 = scalar_select %p20, %s21, %s22
    %p26 = pneg %p20
    %p27 = scmp.eq.s32.totalorder %s11, 1
    %p28 = por %p26, %p27
    %p29 = scmp.ne.s32.totalorder %s21, %s24
    %p30 = scmp.eq.s32.totalorder %s11, 0
    %p31 = por %p29, %p30
    %p32 = scmp.ne.s32.totalorder %s21, %s24
    %p33 = scmp.eq.s32.totalorder %s16, 1
    %p34 = por %p32, %p33
    %p35 = scmp.ne.s32.totalorder %s24, %s25
    %p36 = scmp.eq.s32.totalorder %s16, 0
    %p37 = por %p35, %p36
    %p38 = scmp.ne.s32.totalorder %s24, %s25
    %p39 = scmp.eq.s32.totalorder %s17, 1
    %p40 = por %p38, %p39
    %p42 = scmp.ne.s32.totalorder %s25, %s41
    %p43 = scmp.eq.s32.totalorder %s17, 0
    %p44 = por %p42, %p43
    %s46 = sadd.s32 %s45, 1
    %p49 = scmp.eq.s32.totalorder %s11, 1
    %p50 = scmp.ne.s32.totalorder %s45, %s47
    %p51 = scmp.eq.s32.totalorder %s11, 0
    %p52 = por %p50, %p51
    %p53 = scmp.ne.s32.totalorder %s45, %s47
    %p54 = scmp.eq.s32.totalorder %s16, 1
    %p55 = por %p53, %p54
    %p56 = scmp.ne.s32.totalorder %s47, %s48
    %p57 = scmp.eq.s32.totalorder %s16, 0
    %p58 = por %p56, %p57
    %p59 = scmp.ne.s32.totalorder %s47, %s48
    %p60 = scmp.eq.s32.totalorder %s17, 1
    %p61 = por %p59, %p60
    %p63 = scmp.ne.s32.totalorder %s48, %s62
    %p64 = scmp.eq.s32.totalorder %s17, 0
    %p65 = por %p63, %p64
    %s66 = ssub.s32 %s11, %s18
    %p67 = scmp.eq.s32.totalorder %s66, 0
    %s69 = sadd.s32 %s68, 1
    %s70 = scalar_select %p67, %s68, %s69
    %p73 = pneg %p67
    %p74 = scmp.eq.s32.totalorder %s11, 1
    %p75 = por %p73, %p74
    %p76 = scmp.ne.s32.totalorder %s68, %s71
    %p77 = scmp.eq.s32.totalorder %s11, 0
    %p78 = por %p76, %p77
    %p79 = scmp.ne.s32.totalorder %s68, %s71
    %p80 = scmp.eq.s32.totalorder %s16, 1
    %p81 = por %p79, %p80
    %p82 = scmp.ne.s32.totalorder %s71, %s72
    %p83 = scmp.eq.s32.totalorder %s16, 0
    %p84 = por %p82, %p83
    %p85 = scmp.ne.s32.totalorder %s71, %s72
    %p86 = scmp.eq.s32.totalorder %s17, 1
    %p87 = por %p85, %p86
    %p89 = scmp.ne.s32.totalorder %s72, %s88
    %p90 = scmp.eq.s32.totalorder %s17, 0
    %p91 = por %p89, %p90
    %s92 = ssub.s32 %s11, %s18
    %p93 = scmp.eq.s32.totalorder %s92, 0
    %s95 = sadd.s32 %s94, 1
    %s96 = scalar_select %p93, %s94, %s95
    %p99 = pneg %p93
    %p100 = scmp.eq.s32.totalorder %s11, 1
    %p101 = por %p99, %p100
    %p102 = scmp.ne.s32.totalorder %s94, %s97
    %p103 = scmp.eq.s32.totalorder %s11, 0
    %p104 = por %p102, %p103
    %p105 = scmp.ne.s32.totalorder %s94, %s97
    %p106 = scmp.eq.s32.totalorder %s16, 1
    %p107 = por %p105, %p106
    %p108 = scmp.ne.s32.totalorder %s97, %s98
    %p109 = scmp.eq.s32.totalorder %s16, 0
    %p110 = por %p108, %p109
    %p111 = scmp.ne.s32.totalorder %s97, %s98
    %p112 = scmp.eq.s32.totalorder %s17, 1
    %p113 = por %p111, %p112
    %p115 = scmp.ne.s32.totalorder %s98, %s114
    %p116 = scmp.eq.s32.totalorder %s17, 0
    %p117 = por %p115, %p116
    %s118 = ssub.s32 %s11, %s18
    %p119 = scmp.eq.s32.totalorder %s118, 0
    %s121 = sadd.s32 %s120, 1
    %s122 = scalar_select %p119, %s120, %s121
    %p125 = pneg %p119
    %p126 = scmp.eq.s32.totalorder %s11, 1
    %p127 = por %p125, %p126
    %p128 = scmp.ne.s32.totalorder %s120, %s123
    %p129 = scmp.eq.s32.totalorder %s11, 0
    %p130 = por %p128, %p129
    %p131 = scmp.ne.s32.totalorder %s120, %s123
    %p132 = scmp.eq.s32.totalorder %s16, 1
    %p133 = por %p131, %p132
    %p134 = scmp.ne.s32.totalorder %s123, %s124
    %p135 = scmp.eq.s32.totalorder %s16, 0
    %p136 = por %p134, %p135
    %p137 = scmp.ne.s32.totalorder %s123, %s124
    %p138 = scmp.eq.s32.totalorder %s17, 1
    %p139 = por %p137, %p138
    %p141 = scmp.ne.s32.totalorder %s124, %s140
    %p142 = scmp.eq.s32.totalorder %s17, 0
    %p143 = por %p141, %p142
    %p144 = scmp.le.s32.totalorder 1, %s11
    %p145 = scmp.lt.s32.totalorder %s11, 3
    %p146 = pnand %p144, %p145
    %p147 = pneg %p146
    // Predicated region
    $region9: #{aspp_module_forward.2} parent=5 // pred_check
      _
    $region10: #{aspp_module_forward.2} parent=5 // pred_check_branch
      %149 = sbr.rel (%p146) target = $region12
    $region11: #{aspp_module_forward.2} parent=5 // pred_region
      %s150 = ssub.s32 %s11, 1
      // Predicated region
      $region13: #{aspp_module_forward.2} parent=11 // pred_check
        %p151 = pneg %p58
      $region14: #{aspp_module_forward.2} parent=11 // pred_check_branch
        %153 = sbr.rel (%p151) target = $region16
      $region15: #{aspp_module_forward.2} parent=11 // pred_region
        _
      $region16: #{aspp_module_forward.2} parent=11 // pred_fallthru
        _
    $region12: #{aspp_module_forward.2} parent=5 // pred_fallthru
      _
    %p154 = scmp.lt.s32.totalorder %s11, 2
    // Predicated region
    $region17: #{aspp_module_forward.2} parent=5 // pred_check
      %p155 = pneg %p154
    $region18: #{aspp_module_forward.2} parent=5 // pred_check_branch
      %157 = sbr.rel (%p155) target = $region20
    $region19: #{aspp_module_forward.2} parent=5 // pred_region
      // Predicated region
      $region21: #{aspp_module_forward.2} parent=19 // pred_check
        %p158 = pneg %p31
      $region22: #{aspp_module_forward.2} parent=19 // pred_check_branch
        %160 = sbr.rel (%p158) target = $region24
      $region23: #{aspp_module_forward.2} parent=19 // pred_region
        %p161 = scmp.lt.s32.totalorder %s11, 1
        %s162 = scalar_select %p161, %s11, 1
        %s163 = smul.addr %s162, 60
        %s164 = smul.addr %s163, 4
        %s165 = scalar_lea.vmem %s0, %s164
      $region24: #{aspp_module_forward.2} parent=19 // pred_fallthru
        _
    $region20: #{aspp_module_forward.2} parent=5 // pred_fallthru
      _
    %p166 = scmp.le.s32.totalorder 1, %s11
    %p167 = scmp.lt.s32.totalorder %s11, 3
    %p168 = pnand %p166, %p167
    %p169 = pneg %p168
    // Predicated region
    $region25: #{aspp_module_forward.2} parent=5 // pred_check
      _
    $region26: #{aspp_module_forward.2} parent=5 // pred_check_branch
      %171 = sbr.rel (%p168) target = $region28
    $region27: #{aspp_module_forward.2} parent=5 // pred_region
      %s172 = ssub.s32 %s11, 1
      %p173 = scmp.lt.s32.totalorder %s16, 1
      %s174 = scalar_select %p173, %s16, 1
      %s175 = smul.addr %s174, 60
      %s176 = smul.addr %s175, 4
      %s177 = scalar_lea.vmem %s0, %s176
      %p178 = pneg %p37
      %p179 = pneg %p34
      %p180 = pneg %p58
      %p181 = pneg %p55
      %p182 = pneg %p84
      %p183 = pneg %p81
      %p184 = scmp.lt.s32.totalorder %s16, 1
      %s185 = scalar_select %p184, %s16, 1
      %s186 = smul.addr %s185, 32
      %s187 = smul.addr %s186, 8
      %s188 = scalar_lea.vmem %s2, %s187
      %p189 = pneg %p110
      %p190 = pneg %p107
      %p191 = scmp.lt.s32.totalorder %s16, 1
      %s192 = scalar_select %p191, %s16, 1
      %s193 = scalar_lea.vmem %s3, %s192
      %p194 = pneg %p136
      %p195 = pneg %p133
      %p196 = scmp.lt.s32.totalorder %s16, 1
      %s197 = scalar_select %p196, %s16, 1
      %s198 = scalar_lea.vmem %s4, %s197
      %p199 = scmp.lt.s32.totalorder %s16, 1
      %s200 = scalar_select %p199, %s16, 1
      %s201 = smul.addr %s200, 60
      %s202 = smul.addr %s201, 4
      %s203 = scalar_lea.vmem %s0, %s202
      %p204 = scmp.lt.s32.totalorder %s16, 1
      %s205 = scalar_select %p204, %s16, 1
      %s206 = smul.addr %s205, 32
      %s207 = smul.addr %s206, 8
      %s208 = scalar_lea.vmem %s2, %s207
      %p209 = scmp.lt.s32.totalorder %s16, 1
      %s210 = scalar_select %p209, %s16, 1
      %s211 = scalar_lea.vmem %s3, %s210
      %p212 = scmp.lt.s32.totalorder %s16, 1
      %s213 = scalar_select %p212, %s16, 1
      %s214 = scalar_lea.vmem %s4, %s213
      %v216 = vld [vmem:[%s203] sm:$0xf]
      %v217 = vld [vmem:[%s203 + $0x4] sm:$0xf]
      %v218 = vld [vmem:[%s203 + $0x8] sm:$0x3]
      %v219 = vld [vmem:[%s203 + $0xc] sm:$0xf]
      %v220 = vld [vmem:[%s203 + $0x10] sm:$0xf]
      %v221 = vld [vmem:[%s203 + $0x14] sm:$0x3]
      %v222 = vld [vmem:[%s203 + $0x18] sm:$0xf]
      %v223 = vld [vmem:[%s203 + $0x1c] sm:$0xf]
      %v224 = vld [vmem:[%s203 + $0x20] sm:$0x3]
      %v225 = vld [vmem:[%s203 + $0x24] sm:$0xf]
      %v226 = vld [vmem:[%s203 + $0x28] sm:$0xf]
      %v227 = vld [vmem:[%s203 + $0x2c] sm:$0x3]
      %v228 = vld [vmem:[%s203 + $0x30] sm:$0xf]
      %v229 = vld [vmem:[%s203 + $0x34] sm:$0xf]
      %v230 = vld [vmem:[%s203 + $0x38] sm:$0x3]
      %v231 = vld [vmem:[%s203 + $0x3c] sm:$0xf]
      %v232 = vld [vmem:[%s203 + $0x40] sm:$0xf]
      %v233 = vld [vmem:[%s203 + $0x44] sm:$0x3]
      %v234 = vld [vmem:[%s203 + $0x48] sm:$0xf]
      %v235 = vld [vmem:[%s203 + $0x4c] sm:$0xf]
      %v236 = vld [vmem:[%s203 + $0x50] sm:$0x3]
      %v237 = vld [vmem:[%s203 + $0x54] sm:$0xf]
      %v238 = vld [vmem:[%s203 + $0x58] sm:$0xf]
      %v239 = vld [vmem:[%s203 + $0x5c] sm:$0x3]
      %v240 = vld [vmem:[%s203 + $0x60] sm:$0xf]
      %v241 = vld [vmem:[%s203 + $0x64] sm:$0xf]
      %v242 = vld [vmem:[%s203 + $0x68] sm:$0x3]
      %v243 = vld [vmem:[%s203 + $0x6c] sm:$0xf]
      %v244 = vld [vmem:[%s203 + $0x70] sm:$0xf]
      %v245 = vld [vmem:[%s203 + $0x74] sm:$0x3]
      %v246 = vld [vmem:[%s203 + $0x78] sm:$0xf]
      %v247 = vld [vmem:[%s203 + $0x7c] sm:$0xf]
      %v248 = vld [vmem:[%s203 + $0x80] sm:$0x3]
      %v249 = vld [vmem:[%s203 + $0x84] sm:$0xf]
      %v250 = vld [vmem:[%s203 + $0x88] sm:$0xf]
      %v251 = vld [vmem:[%s203 + $0x8c] sm:$0x3]
      %v252 = vld [vmem:[%s203 + $0x90] sm:$0xf]
      %v253 = vld [vmem:[%s203 + $0x94] sm:$0xf]
      %v254 = vld [vmem:[%s203 + $0x98] sm:$0x3]
      %v255 = vld [vmem:[%s203 + $0x9c] sm:$0xf]
      %v256 = vld [vmem:[%s203 + $0xa0] sm:$0xf]
      %v257 = vld [vmem:[%s203 + $0xa4] sm:$0x3]
      %v258 = vld [vmem:[%s203 + $0xa8] sm:$0xf]
      %v259 = vld [vmem:[%s203 + $0xac] sm:$0xf]
      %v260 = vld [vmem:[%s203 + $0xb0] sm:$0x3]
      %v261 = vld [vmem:[%s203 + $0xb4] sm:$0xf]
      %v262 = vld [vmem:[%s203 + $0xb8] sm:$0xf]
      %v263 = vld [vmem:[%s203 + $0xbc] sm:$0x3]
      %v264 = vld [vmem:[%s203 + $0xc0] sm:$0xf]
      %v265 = vld [vmem:[%s203 + $0xc4] sm:$0xf]
      %v266 = vld [vmem:[%s203 + $0xc8] sm:$0x3]
      %v267 = vld [vmem:[%s203 + $0xcc] sm:$0xf]
      %v268 = vld [vmem:[%s203 + $0xd0] sm:$0xf]
      %v269 = vld [vmem:[%s203 + $0xd4] sm:$0x3]
      %v270 = vld [vmem:[%s203 + $0xd8] sm:$0xf]
      %v271 = vld [vmem:[%s203 + $0xdc] sm:$0xf]
      %v272 = vld [vmem:[%s203 + $0xe0] sm:$0x3]
      %v273 = vld [vmem:[%s203 + $0xe4] sm:$0xf]
      %v274 = vld [vmem:[%s203 + $0xe8] sm:$0xf]
      %v275 = vld [vmem:[%s203 + $0xec] sm:$0x3]
      %v276 = vld [vmem:[%s1] sm:$0xf]
      %v277 = vld [vmem:[%s1 + $0x4] sm:$0xf]
      %v278 = vld [vmem:[%s1 + $0x8] sm:$0xf]
      %v279 = vld [vmem:[%s1 + $0xc] sm:$0xf]
      %v280 = vld [vmem:[%s1 + $0x10] sm:$0x3]
      %vm329 = vcmask 1042432
      %vm330 = vcmask 1046532
      %vm331 = vmor %vm329, %vm330
      %v332 = vrot.slane %v216, 5
      %v333 = vrot.slane %v332, 4
      %v334 = vrot.slane %v217, 5
      %v335 = vsel %vm331, %v333, %v334
      %v336 = vrot.slane %v334, 4
      %v337 = vrot.slane %v218, 5
      %v338 = vsel %vm331, %v336, %v337
      %v339 = vrot.slane %v219, 5
      %v340 = vrot.slane %v339, 4
      %v341 = vrot.slane %v220, 5
      %v342 = vsel %vm331, %v340, %v341
      %v343 = vrot.slane %v341, 4
      %v344 = vrot.slane %v221, 5
      %v345 = vsel %vm331, %v343, %v344
      %v346 = vrot.slane %v222, 5
      %v347 = vrot.slane %v346, 4
      %v348 = vrot.slane %v223, 5
      %v349 = vsel %vm331, %v347, %v348
      %v350 = vrot.slane %v348, 4
      %v351 = vrot.slane %v224, 5
      %v352 = vsel %vm331, %v350, %v351
      %v353 = vrot.slane %v225, 5
      %v354 = vrot.slane %v353, 4
      %v355 = vrot.slane %v226, 5
      %v356 = vsel %vm331, %v354, %v355
      %v357 = vrot.slane %v355, 4
      %v358 = vrot.slane %v227, 5
      %v359 = vsel %vm331, %v357, %v358
      %v360 = vrot.slane %v228, 5
      %v361 = vrot.slane %v360, 4
      %v362 = vrot.slane %v229, 5
      %v363 = vsel %vm331, %v361, %v362
      %v364 = vrot.slane %v362, 4
      %v365 = vrot.slane %v230, 5
      %v366 = vsel %vm331, %v364, %v365
      %v367 = vrot.slane %v231, 5
      %v368 = vrot.slane %v367, 4
      %v369 = vrot.slane %v232, 5
      %v370 = vsel %vm331, %v368, %v369
      %v371 = vrot.slane %v369, 4
      %v372 = vrot.slane %v233, 5
      %v373 = vsel %vm331, %v371, %v372
      %v374 = vrot.slane %v234, 5
      %v375 = vrot.slane %v374, 4
      %v376 = vrot.slane %v235, 5
      %v377 = vsel %vm331, %v375, %v376
      %v378 = vrot.slane %v376, 4
      %v379 = vrot.slane %v236, 5
      %v380 = vsel %vm331, %v378, %v379
      %v381 = vrot.slane %v237, 5
      %v382 = vrot.slane %v381, 4
      %v383 = vrot.slane %v238, 5
      %v384 = vsel %vm331, %v382, %v383
      %v385 = vrot.slane %v383, 4
      %v386 = vrot.slane %v239, 5
      %v387 = vsel %vm331, %v385, %v386
      %v388 = vrot.slane %v240, 5
      %v389 = vrot.slane %v388, 4
      %v390 = vrot.slane %v241, 5
      %v391 = vsel %vm331, %v389, %v390
      %v392 = vrot.slane %v390, 4
      %v393 = vrot.slane %v242, 5
      %v394 = vsel %vm331, %v392, %v393
      %v395 = vrot.slane %v243, 5
      %v396 = vrot.slane %v395, 4
      %v397 = vrot.slane %v244, 5
      %v398 = vsel %vm331, %v396, %v397
      %v399 = vrot.slane %v397, 4
      %v400 = vrot.slane %v245, 5
      %v401 = vsel %vm331, %v399, %v400
      %v402 = vrot.slane %v246, 5
      %v403 = vrot.slane %v402, 4
      %v404 = vrot.slane %v247, 5
      %v405 = vsel %vm331, %v403, %v404
      %v406 = vrot.slane %v404, 4
      %v407 = vrot.slane %v248, 5
      %v408 = vsel %vm331, %v406, %v407
      %v409 = vrot.slane %v249, 5
      %v410 = vrot.slane %v409, 4
      %v411 = vrot.slane %v250, 5
      %v412 = vsel %vm331, %v410, %v411
      %v413 = vrot.slane %v411, 4
      %v414 = vrot.slane %v251, 5
      %v415 = vsel %vm331, %v413, %v414
      %v416 = vrot.slane %v252, 5
      %v417 = vrot.slane %v416, 4
      %v418 = vrot.slane %v253, 5
      %v419 = vsel %vm331, %v417, %v418
      %v420 = vrot.slane %v418, 4
      %v421 = vrot.slane %v254, 5
      %v422 = vsel %vm331, %v420, %v421
      %v423 = vrot.slane %v255, 5
      %v424 = vrot.slane %v423, 4
      %v425 = vrot.slane %v256, 5
      %v426 = vsel %vm331, %v424, %v425
      %v427 = vrot.slane %v425, 4
      %v428 = vrot.slane %v257, 5
      %v429 = vsel %vm331, %v427, %v428
      %v430 = vrot.slane %v258, 5
      %v431 = vrot.slane %v430, 4
      %v432 = vrot.slane %v259, 5
      %v433 = vsel %vm331, %v431, %v432
      %v434 = vrot.slane %v432, 4
      %v435 = vrot.slane %v260, 5
      %v436 = vsel %vm331, %v434, %v435
      %v437 = vrot.slane %v261, 5
      %v438 = vrot.slane %v437, 4
      %v439 = vrot.slane %v262, 5
      %v440 = vsel %vm331, %v438, %v439
      %v441 = vrot.slane %v439, 4
      %v442 = vrot.slane %v263, 5
      %v443 = vsel %vm331, %v441, %v442
      %vm444 = vcmask 1041408
      %vm445 = vcmask 1045508
      %vm446 = vmor %vm444, %vm445
      %v447 = vrot.slane %v216, 6
      %v448 = vrot.slane %v447, 4
      %v449 = vrot.slane %v217, 6
      %v450 = vsel %vm446, %v448, %v449
      %v451 = vrot.slane %v449, 4
      %v452 = vrot.slane %v218, 6
      %v453 = vsel %vm446, %v451, %v452
      %v454 = vrot.slane %v219, 6
      %v455 = vrot.slane %v454, 4
      %v456 = vrot.slane %v220, 6
      %v457 = vsel %vm446, %v455, %v456
      %v458 = vrot.slane %v456, 4
      %v459 = vrot.slane %v221, 6
      %v460 = vsel %vm446, %v458, %v459
      %v461 = vrot.slane %v222, 6
      %v462 = vrot.slane %v461, 4
      %v463 = vrot.slane %v223, 6
      %v464 = vsel %vm446, %v462, %v463
      %v465 = vrot.slane %v463, 4
      %v466 = vrot.slane %v224, 6
      %v467 = vsel %vm446, %v465, %v466
      %v468 = vrot.slane %v225, 6
      %v469 = vrot.slane %v468, 4
      %v470 = vrot.slane %v226, 6
      %v471 = vsel %vm446, %v469, %v470
      %v472 = vrot.slane %v470, 4
      %v473 = vrot.slane %v227, 6
      %v474 = vsel %vm446, %v472, %v473
      %v475 = vrot.slane %v228, 6
      %v476 = vrot.slane %v475, 4
      %v477 = vrot.slane %v229, 6
      %v478 = vsel %vm446, %v476, %v477
      %v479 = vrot.slane %v477, 4
      %v480 = vrot.slane %v230, 6
      %v481 = vsel %vm446, %v479, %v480
      %v482 = vrot.slane %v231, 6
      %v483 = vrot.slane %v482, 4
      %v484 = vrot.slane %v232, 6
      %v485 = vsel %vm446, %v483, %v484
      %v486 = vrot.slane %v484, 4
      %v487 = vrot.slane %v233, 6
      %v488 = vsel %vm446, %v486, %v487
      %v489 = vrot.slane %v234, 6
      %v490 = vrot.slane %v489, 4
      %v491 = vrot.slane %v235, 6
      %v492 = vsel %vm446, %v490, %v491
      %v493 = vrot.slane %v491, 4
      %v494 = vrot.slane %v236, 6
      %v495 = vsel %vm446, %v493, %v494
      %v496 = vrot.slane %v237, 6
      %v497 = vrot.slane %v496, 4
      %v498 = vrot.slane %v238, 6
      %v499 = vsel %vm446, %v497, %v498
      %v500 = vrot.slane %v498, 4
      %v501 = vrot.slane %v239, 6
      %v502 = vsel %vm446, %v500, %v501
      %v503 = vrot.slane %v240, 6
      %v504 = vrot.slane %v503, 4
      %v505 = vrot.slane %v241, 6
      %v506 = vsel %vm446, %v504, %v505
      %v507 = vrot.slane %v505, 4
      %v508 = vrot.slane %v242, 6
      %v509 = vsel %vm446, %v507, %v508
      %v510 = vrot.slane %v243, 6
      %v511 = vrot.slane %v510, 4
      %v512 = vrot.slane %v244, 6
      %v513 = vsel %vm446, %v511, %v512
      %v514 = vrot.slane %v512, 4
      %v515 = vrot.slane %v245, 6
      %v516 = vsel %vm446, %v514, %v515
      %v517 = vrot.slane %v246, 6
      %v518 = vrot.slane %v517, 4
      %v519 = vrot.slane %v247, 6
      %v520 = vsel %vm446, %v518, %v519
      %v521 = vrot.slane %v519, 4
      %v522 = vrot.slane %v248, 6
      %v523 = vsel %vm446, %v521, %v522
      %v524 = vrot.slane %v249, 6
      %v525 = vrot.slane %v524, 4
      %v526 = vrot.slane %v250, 6
      %v527 = vsel %vm446, %v525, %v526
      %v528 = vrot.slane %v526, 4
      %v529 = vrot.slane %v251, 6
      %v530 = vsel %vm446, %v528, %v529
      %v531 = vrot.slane %v252, 6
      %v532 = vrot.slane %v531, 4
      %v533 = vrot.slane %v253, 6
      %v534 = vsel %vm446, %v532, %v533
      %v535 = vrot.slane %v533, 4
      %v536 = vrot.slane %v254, 6
      %v537 = vsel %vm446, %v535, %v536
      %v538 = vrot.slane %v255, 6
      %v539 = vrot.slane %v538, 4
      %v540 = vrot.slane %v256, 6
      %v541 = vsel %vm446, %v539, %v540
      %v542 = vrot.slane %v540, 4
      %v543 = vrot.slane %v257, 6
      %v544 = vsel %vm446, %v542, %v543
      %v545 = vrot.slane %v258, 6
      %v546 = vrot.slane %v545, 4
      %v547 = vrot.slane %v259, 6
      %v548 = vsel %vm446, %v546, %v547
      %v549 = vrot.slane %v547, 4
      %v550 = vrot.slane %v260, 6
      %v551 = vsel %vm446, %v549, %v550
      %v552 = vrot.slane %v261, 6
      %v553 = vrot.slane %v552, 4
      %v554 = vrot.slane %v262, 6
      %v555 = vsel %vm446, %v553, %v554
      %v556 = vrot.slane %v554, 4
      %v557 = vrot.slane %v263, 6
      %v558 = vsel %vm446, %v556, %v557
      %v565 = vrot.slane %v264, 5
      %v566 = vrot.slane %v565, 4
      %v567 = vrot.slane %v265, 5
      %v568 = vsel %vm331, %v566, %v567
      %v569 = vrot.slane %v567, 4
      %v570 = vrot.slane %v266, 5
      %v571 = vsel %vm331, %v569, %v570
      %v572 = vrot.slane %v267, 5
      %v573 = vrot.slane %v572, 4
      %v574 = vrot.slane %v268, 5
      %v575 = vsel %vm331, %v573, %v574
      %v576 = vrot.slane %v574, 4
      %v577 = vrot.slane %v269, 5
      %v578 = vsel %vm331, %v576, %v577
      %v579 = vrot.slane %v264, 6
      %v580 = vrot.slane %v579, 4
      %v581 = vrot.slane %v265, 6
      %v582 = vsel %vm446, %v580, %v581
      %v583 = vrot.slane %v581, 4
      %v584 = vrot.slane %v266, 6
      %v585 = vsel %vm446, %v583, %v584
      %v586 = vrot.slane %v267, 6
      %v587 = vrot.slane %v586, 4
      %v588 = vrot.slane %v268, 6
      %v589 = vsel %vm446, %v587, %v588
      %v590 = vrot.slane %v588, 4
      %v591 = vrot.slane %v269, 6
      %v592 = vsel %vm446, %v590, %v591
      %v599 = vrot.slane %v270, 5
      %v600 = vrot.slane %v599, 4
      %v601 = vrot.slane %v271, 5
      %v602 = vsel %vm331, %v600, %v601
      %v603 = vrot.slane %v601, 4
      %v604 = vrot.slane %v272, 5
      %v605 = vsel %vm331, %v603, %v604
      %v606 = vrot.slane %v273, 5
      %v607 = vrot.slane %v606, 4
      %v608 = vrot.slane %v274, 5
      %v609 = vsel %vm331, %v607, %v608
      %v610 = vrot.slane %v608, 4
      %v611 = vrot.slane %v275, 5
      %v612 = vsel %vm331, %v610, %v611
      %v613 = vrot.slane %v270, 6
      %v614 = vrot.slane %v613, 4
      %v615 = vrot.slane %v271, 6
      %v616 = vsel %vm446, %v614, %v615
      %v617 = vrot.slane %v615, 4
      %v618 = vrot.slane %v272, 6
      %v619 = vsel %vm446, %v617, %v618
      %v620 = vrot.slane %v273, 6
      %v621 = vrot.slane %v620, 4
      %v622 = vrot.slane %v274, 6
      %v623 = vsel %vm446, %v621, %v622
      %v624 = vrot.slane %v622, 4
      %v625 = vrot.slane %v275, 6
      %v626 = vsel %vm446, %v624, %v625
      %v627 = vunpack.c.l.b16 %v216
      %v628 = vunpack.c.l.b16 %v217
      %v629 = vunpack.c.l.b16 %v219
      %v630 = vunpack.c.l.b16 %v220
      %v631 = vunpack.c.l.b16 %v222
      %v632 = vunpack.c.l.b16 %v223
      %v633 = vunpack.c.l.b16 %v225
      %v634 = vunpack.c.l.b16 %v226
      %v635 = vunpack.c.l.b16 %v228
      %v636 = vunpack.c.l.b16 %v229
      %v637 = vunpack.c.l.b16 %v231
      %v638 = vunpack.c.l.b16 %v232
      %v639 = vunpack.c.l.b16 %v234
      %v640 = vunpack.c.l.b16 %v235
      %v641 = vunpack.c.l.b16 %v237
      %v642 = vunpack.c.l.b16 %v238
      %v643 = vunpack.c.l.b16 %v240
      %v644 = vunpack.c.l.b16 %v241
      %v645 = vunpack.c.l.b16 %v243
      %v646 = vunpack.c.l.b16 %v244
      %v647 = vunpack.c.l.b16 %v246
      %v648 = vunpack.c.l.b16 %v247
      %v649 = vunpack.c.l.b16 %v249
      %v650 = vunpack.c.l.b16 %v250
      %v651 = vunpack.c.l.b16 %v252
      %v652 = vunpack.c.l.b16 %v253
      %v653 = vunpack.c.l.b16 %v255
      %v654 = vunpack.c.l.b16 %v256
      %v655 = vunpack.c.l.b16 %v258
      %v656 = vunpack.c.l.b16 %v259
      %v657 = vunpack.c.l.b16 %v261
      %v658 = vunpack.c.l.b16 %v262
      %v659 = vpack.c.b16 %v628, %v627
      %v660 = vpack.c.b16 %v630, %v629
      %v661 = vpack.c.b16 %v632, %v631
      %v662 = vpack.c.b16 %v634, %v633
      %v663 = vpack.c.b16 %v636, %v635
      %v664 = vpack.c.b16 %v638, %v637
      %v665 = vpack.c.b16 %v640, %v639
      %v666 = vpack.c.b16 %v642, %v641
      %v667 = vpack.c.b16 %v644, %v643
      %v668 = vpack.c.b16 %v646, %v645
      %v669 = vpack.c.b16 %v648, %v647
      %v670 = vpack.c.b16 %v650, %v649
      %v671 = vpack.c.b16 %v652, %v651
      %v672 = vpack.c.b16 %v654, %v653
      %v673 = vpack.c.b16 %v656, %v655
      %v674 = vpack.c.b16 %v658, %v657
      %v675 = vunpack.c.l.b16 %v335
      %v676 = vunpack.c.l.b16 %v338
      %v677 = vunpack.c.l.b16 %v342
      %v678 = vunpack.c.l.b16 %v345
      %v679 = vunpack.c.l.b16 %v349
      %v680 = vunpack.c.l.b16 %v352
      %v681 = vunpack.c.l.b16 %v356
      %v682 = vunpack.c.l.b16 %v359
      %v683 = vunpack.c.l.b16 %v363
      %v684 = vunpack.c.l.b16 %v366
      %v685 = vunpack.c.l.b16 %v370
      %v686 = vunpack.c.l.b16 %v373
      %v687 = vunpack.c.l.b16 %v377
      %v688 = vunpack.c.l.b16 %v380
      %v689 = vunpack.c.l.b16 %v384
      %v690 = vunpack.c.l.b16 %v387
      %v691 = vunpack.c.l.b16 %v391
      %v692 = vunpack.c.l.b16 %v394
      %v693 = vunpack.c.l.b16 %v398
      %v694 = vunpack.c.l.b16 %v401
      %v695 = vunpack.c.l.b16 %v405
      %v696 = vunpack.c.l.b16 %v408
      %v697 = vunpack.c.l.b16 %v412
      %v698 = vunpack.c.l.b16 %v415
      %v699 = vunpack.c.l.b16 %v419
      %v700 = vunpack.c.l.b16 %v422
      %v701 = vunpack.c.l.b16 %v426
      %v702 = vunpack.c.l.b16 %v429
      %v703 = vunpack.c.l.b16 %v433
      %v704 = vunpack.c.l.b16 %v436
      %v705 = vunpack.c.l.b16 %v440
      %v706 = vunpack.c.l.b16 %v443
      %v707 = vpack.c.b16 %v676, %v675
      %v708 = vpack.c.b16 %v678, %v677
      %v709 = vpack.c.b16 %v680, %v679
      %v710 = vpack.c.b16 %v682, %v681
      %v711 = vpack.c.b16 %v684, %v683
      %v712 = vpack.c.b16 %v686, %v685
      %v713 = vpack.c.b16 %v688, %v687
      %v714 = vpack.c.b16 %v690, %v689
      %v715 = vpack.c.b16 %v692, %v691
      %v716 = vpack.c.b16 %v694, %v693
      %v717 = vpack.c.b16 %v696, %v695
      %v718 = vpack.c.b16 %v698, %v697
      %v719 = vpack.c.b16 %v700, %v699
      %v720 = vpack.c.b16 %v702, %v701
      %v721 = vpack.c.b16 %v704, %v703
      %v722 = vpack.c.b16 %v706, %v705
      %723 = vrot.lane.b32.xlu0 %v707, 4
      %v724 = vpop.permute.xlu0 %723
      %725 = vrot.lane.b32.xlu0 %v708, 4
      %v726 = vpop.permute.xlu0 %725
      %727 = vrot.lane.b32.xlu0 %v709, 4
      %v728 = vpop.permute.xlu0 %727
      %729 = vrot.lane.b32.xlu0 %v710, 4
      %v730 = vpop.permute.xlu0 %729
      %731 = vrot.lane.b32.xlu0 %v711, 4
      %v732 = vpop.permute.xlu0 %731
      %733 = vrot.lane.b32.xlu0 %v712, 4
      %v734 = vpop.permute.xlu0 %733
      %735 = vrot.lane.b32.xlu0 %v713, 4
      %v736 = vpop.permute.xlu0 %735
      %737 = vrot.lane.b32.xlu0 %v714, 4
      %v738 = vpop.permute.xlu0 %737
      %739 = vrot.lane.b32.xlu0 %v715, 4
      %v740 = vpop.permute.xlu0 %739
      %741 = vrot.lane.b32.xlu0 %v716, 4
      %v742 = vpop.permute.xlu0 %741
      %743 = vrot.lane.b32.xlu0 %v717, 4
      %v744 = vpop.permute.xlu0 %743
      %745 = vrot.lane.b32.xlu0 %v718, 4
      %v746 = vpop.permute.xlu0 %745
      %747 = vrot.lane.b32.xlu0 %v719, 4
      %v748 = vpop.permute.xlu0 %747
      %749 = vrot.lane.b32.xlu0 %v720, 4
      %v750 = vpop.permute.xlu0 %749
      %751 = vrot.lane.b32.xlu0 %v721, 4
      %v752 = vpop.permute.xlu0 %751
      %753 = vrot.lane.b32.xlu0 %v722, 4
      %v754 = vpop.permute.xlu0 %753
      %v755 = vunpack.c.l.b16 %v450
      %v756 = vunpack.c.l.b16 %v453
      %v757 = vunpack.c.l.b16 %v457
      %v758 = vunpack.c.l.b16 %v460
      %v759 = vunpack.c.l.b16 %v464
      %v760 = vunpack.c.l.b16 %v467
      %v761 = vunpack.c.l.b16 %v471
      %v762 = vunpack.c.l.b16 %v474
      %v763 = vunpack.c.l.b16 %v478
      %v764 = vunpack.c.l.b16 %v481
      %v765 = vunpack.c.l.b16 %v485
      %v766 = vunpack.c.l.b16 %v488
      %v767 = vunpack.c.l.b16 %v492
      %v768 = vunpack.c.l.b16 %v495
      %v769 = vunpack.c.l.b16 %v499
      %v770 = vunpack.c.l.b16 %v502
      %v771 = vunpack.c.l.b16 %v506
      %v772 = vunpack.c.l.b16 %v509
      %v773 = vunpack.c.l.b16 %v513
      %v774 = vunpack.c.l.b16 %v516
      %v775 = vunpack.c.l.b16 %v520
      %v776 = vunpack.c.l.b16 %v523
      %v777 = vunpack.c.l.b16 %v527
      %v778 = vunpack.c.l.b16 %v530
      %v779 = vunpack.c.l.b16 %v534
      %v780 = vunpack.c.l.b16 %v537
      %v781 = vunpack.c.l.b16 %v541
      %v782 = vunpack.c.l.b16 %v544
      %v783 = vunpack.c.l.b16 %v548
      %v784 = vunpack.c.l.b16 %v551
      %v785 = vunpack.c.l.b16 %v555
      %v786 = vunpack.c.l.b16 %v558
      %v787 = vpack.c.b16 %v756, %v755
      %v788 = vpack.c.b16 %v758, %v757
      %v789 = vpack.c.b16 %v760, %v759
      %v790 = vpack.c.b16 %v762, %v761
      %v791 = vpack.c.b16 %v764, %v763
      %v792 = vpack.c.b16 %v766, %v765
      %v793 = vpack.c.b16 %v768, %v767
      %v794 = vpack.c.b16 %v770, %v769
      %v795 = vpack.c.b16 %v772, %v771
      %v796 = vpack.c.b16 %v774, %v773
      %v797 = vpack.c.b16 %v776, %v775
      %v798 = vpack.c.b16 %v778, %v777
      %v799 = vpack.c.b16 %v780, %v779
      %v800 = vpack.c.b16 %v782, %v781
      %v801 = vpack.c.b16 %v784, %v783
      %v802 = vpack.c.b16 %v786, %v785
      %803 = vrot.lane.b32.xlu0 %v787, 8
      %v804 = vpop.permute.xlu0 %803
      %805 = vrot.lane.b32.xlu0 %v788, 8
      %v806 = vpop.permute.xlu0 %805
      %807 = vrot.lane.b32.xlu0 %v789, 8
      %v808 = vpop.permute.xlu0 %807
      %809 = vrot.lane.b32.xlu0 %v790, 8
      %v810 = vpop.permute.xlu0 %809
      %811 = vrot.lane.b32.xlu0 %v791, 8
      %v812 = vpop.permute.xlu0 %811
      %813 = vrot.lane.b32.xlu0 %v792, 8
      %v814 = vpop.permute.xlu0 %813
      %815 = vrot.lane.b32.xlu0 %v793, 8
      %v816 = vpop.permute.xlu0 %815
      %817 = vrot.lane.b32.xlu0 %v794, 8
      %v818 = vpop.permute.xlu0 %817
      %819 = vrot.lane.b32.xlu0 %v795, 8
      %v820 = vpop.permute.xlu0 %819
      %821 = vrot.lane.b32.xlu0 %v796, 8
      %v822 = vpop.permute.xlu0 %821
      %823 = vrot.lane.b32.xlu0 %v797, 8
      %v824 = vpop.permute.xlu0 %823
      %825 = vrot.lane.b32.xlu0 %v798, 8
      %v826 = vpop.permute.xlu0 %825
      %827 = vrot.lane.b32.xlu0 %v799, 8
      %v828 = vpop.permute.xlu0 %827
      %829 = vrot.lane.b32.xlu0 %v800, 8
      %v830 = vpop.permute.xlu0 %829
      %831 = vrot.lane.b32.xlu0 %v801, 8
      %v832 = vpop.permute.xlu0 %831
      %833 = vrot.lane.b32.xlu0 %v802, 8
      %v834 = vpop.permute.xlu0 %833
      %v835 = vunpack.c.l.b16 %v264
      %v836 = vunpack.c.l.b16 %v265
      %v837 = vunpack.c.l.b16 %v267
      %v838 = vunpack.c.l.b16 %v268
      %v839 = vpack.c.b16 %v836, %v835
      %v840 = vpack.c.b16 %v838, %v837
      %841 = vrot.lane.b32.xlu0 %v661, 12
      %v842 = vpop.permute.xlu0 %841
      %843 = vrot.lane.b32.xlu0 %v662, 12
      %v844 = vpop.permute.xlu0 %843
      %845 = vrot.lane.b32.xlu0 %v663, 12
      %v846 = vpop.permute.xlu0 %845
      %847 = vrot.lane.b32.xlu0 %v664, 12
      %v848 = vpop.permute.xlu0 %847
      %849 = vrot.lane.b32.xlu0 %v665, 12
      %v850 = vpop.permute.xlu0 %849
      %851 = vrot.lane.b32.xlu0 %v666, 12
      %v852 = vpop.permute.xlu0 %851
      %853 = vrot.lane.b32.xlu0 %v667, 12
      %v854 = vpop.permute.xlu0 %853
      %855 = vrot.lane.b32.xlu0 %v668, 12
      %v856 = vpop.permute.xlu0 %855
      %857 = vrot.lane.b32.xlu0 %v669, 12
      %v858 = vpop.permute.xlu0 %857
      %859 = vrot.lane.b32.xlu0 %v670, 12
      %v860 = vpop.permute.xlu0 %859
      %861 = vrot.lane.b32.xlu0 %v671, 12
      %v862 = vpop.permute.xlu0 %861
      %863 = vrot.lane.b32.xlu0 %v672, 12
      %v864 = vpop.permute.xlu0 %863
      %865 = vrot.lane.b32.xlu0 %v673, 12
      %v866 = vpop.permute.xlu0 %865
      %867 = vrot.lane.b32.xlu0 %v674, 12
      %v868 = vpop.permute.xlu0 %867
      %869 = vrot.lane.b32.xlu0 %v839, 12
      %v870 = vpop.permute.xlu0 %869
      %871 = vrot.lane.b32.xlu0 %v840, 12
      %v872 = vpop.permute.xlu0 %871
      %v873 = vunpack.c.l.b16 %v568
      %v874 = vunpack.c.l.b16 %v571
      %v875 = vunpack.c.l.b16 %v575
      %v876 = vunpack.c.l.b16 %v578
      %v877 = vpack.c.b16 %v874, %v873
      %v878 = vpack.c.b16 %v876, %v875
      %879 = vrot.lane.b32.xlu0 %v709, 16
      %v880 = vpop.permute.xlu0 %879
      %881 = vrot.lane.b32.xlu0 %v710, 16
      %v882 = vpop.permute.xlu0 %881
      %883 = vrot.lane.b32.xlu0 %v711, 16
      %v884 = vpop.permute.xlu0 %883
      %885 = vrot.lane.b32.xlu0 %v712, 16
      %v886 = vpop.permute.xlu0 %885
      %887 = vrot.lane.b32.xlu0 %v713, 16
      %v888 = vpop.permute.xlu0 %887
      %889 = vrot.lane.b32.xlu0 %v714, 16
      %v890 = vpop.permute.xlu0 %889
      %891 = vrot.lane.b32.xlu0 %v715, 16
      %v892 = vpop.permute.xlu0 %891
      %893 = vrot.lane.b32.xlu0 %v716, 16
      %v894 = vpop.permute.xlu0 %893
      %895 = vrot.lane.b32.xlu0 %v717, 16
      %v896 = vpop.permute.xlu0 %895
      %897 = vrot.lane.b32.xlu0 %v718, 16
      %v898 = vpop.permute.xlu0 %897
      %899 = vrot.lane.b32.xlu0 %v719, 16
      %v900 = vpop.permute.xlu0 %899
      %901 = vrot.lane.b32.xlu0 %v720, 16
      %v902 = vpop.permute.xlu0 %901
      %903 = vrot.lane.b32.xlu0 %v721, 16
      %v904 = vpop.permute.xlu0 %903
      %905 = vrot.lane.b32.xlu0 %v722, 16
      %v906 = vpop.permute.xlu0 %905
      %907 = vrot.lane.b32.xlu0 %v877, 16
      %v908 = vpop.permute.xlu0 %907
      %909 = vrot.lane.b32.xlu0 %v878, 16
      %v910 = vpop.permute.xlu0 %909
      %v911 = vunpack.c.l.b16 %v582
      %v912 = vunpack.c.l.b16 %v585
      %v913 = vunpack.c.l.b16 %v589
      %v914 = vunpack.c.l.b16 %v592
      %v915 = vpack.c.b16 %v912, %v911
      %v916 = vpack.c.b16 %v914, %v913
      %917 = vrot.lane.b32.xlu0 %v789, 20
      %v918 = vpop.permute.xlu0 %917
      %919 = vrot.lane.b32.xlu0 %v790, 20
      %v920 = vpop.permute.xlu0 %919
      %921 = vrot.lane.b32.xlu0 %v791, 20
      %v922 = vpop.permute.xlu0 %921
      %923 = vrot.lane.b32.xlu0 %v792, 20
      %v924 = vpop.permute.xlu0 %923
      %925 = vrot.lane.b32.xlu0 %v793, 20
      %v926 = vpop.permute.xlu0 %925
      %927 = vrot.lane.b32.xlu0 %v794, 20
      %v928 = vpop.permute.xlu0 %927
      %929 = vrot.lane.b32.xlu0 %v795, 20
      %v930 = vpop.permute.xlu0 %929
      %931 = vrot.lane.b32.xlu0 %v796, 20
      %v932 = vpop.permute.xlu0 %931
      %933 = vrot.lane.b32.xlu0 %v797, 20
      %v934 = vpop.permute.xlu0 %933
      %935 = vrot.lane.b32.xlu0 %v798, 20
      %v936 = vpop.permute.xlu0 %935
      %937 = vrot.lane.b32.xlu0 %v799, 20
      %v938 = vpop.permute.xlu0 %937
      %939 = vrot.lane.b32.xlu0 %v800, 20
      %v940 = vpop.permute.xlu0 %939
      %941 = vrot.lane.b32.xlu0 %v801, 20
      %v942 = vpop.permute.xlu0 %941
      %943 = vrot.lane.b32.xlu0 %v802, 20
      %v944 = vpop.permute.xlu0 %943
      %945 = vrot.lane.b32.xlu0 %v915, 20
      %v946 = vpop.permute.xlu0 %945
      %947 = vrot.lane.b32.xlu0 %v916, 20
      %v948 = vpop.permute.xlu0 %947
      %v949 = vunpack.c.l.b16 %v270
      %v950 = vunpack.c.l.b16 %v271
      %v951 = vunpack.c.l.b16 %v273
      %v952 = vunpack.c.l.b16 %v274
      %v953 = vpack.c.b16 %v950, %v949
      %v954 = vpack.c.b16 %v952, %v951
      %955 = vrot.lane.b32.xlu0 %v663, 24
      %v956 = vpop.permute.xlu0 %955
      %957 = vrot.lane.b32.xlu0 %v664, 24
      %v958 = vpop.permute.xlu0 %957
      %959 = vrot.lane.b32.xlu0 %v665, 24
      %v960 = vpop.permute.xlu0 %959
      %961 = vrot.lane.b32.xlu0 %v666, 24
      %v962 = vpop.permute.xlu0 %961
      %963 = vrot.lane.b32.xlu0 %v667, 24
      %v964 = vpop.permute.xlu0 %963
      %965 = vrot.lane.b32.xlu0 %v668, 24
      %v966 = vpop.permute.xlu0 %965
      %967 = vrot.lane.b32.xlu0 %v669, 24
      %v968 = vpop.permute.xlu0 %967
      %969 = vrot.lane.b32.xlu0 %v670, 24
      %v970 = vpop.permute.xlu0 %969
      %971 = vrot.lane.b32.xlu0 %v671, 24
      %v972 = vpop.permute.xlu0 %971
      %973 = vrot.lane.b32.xlu0 %v672, 24
      %v974 = vpop.permute.xlu0 %973
      %975 = vrot.lane.b32.xlu0 %v673, 24
      %v976 = vpop.permute.xlu0 %975
      %977 = vrot.lane.b32.xlu0 %v674, 24
      %v978 = vpop.permute.xlu0 %977
      %979 = vrot.lane.b32.xlu0 %v839, 24
      %v980 = vpop.permute.xlu0 %979
      %981 = vrot.lane.b32.xlu0 %v840, 24
      %v982 = vpop.permute.xlu0 %981
      %983 = vrot.lane.b32.xlu0 %v953, 24
      %v984 = vpop.permute.xlu0 %983
      %985 = vrot.lane.b32.xlu0 %v954, 24
      %v986 = vpop.permute.xlu0 %985
      %v987 = vunpack.c.l.b16 %v602
      %v988 = vunpack.c.l.b16 %v605
      %v989 = vunpack.c.l.b16 %v609
      %v990 = vunpack.c.l.b16 %v612
      %v991 = vpack.c.b16 %v988, %v987
      %v992 = vpack.c.b16 %v990, %v989
      %993 = vrot.lane.b32.xlu0 %v711, 28
      %v994 = vpop.permute.xlu0 %993
      %995 = vrot.lane.b32.xlu0 %v712, 28
      %v996 = vpop.permute.xlu0 %995
      %997 = vrot.lane.b32.xlu0 %v713, 28
      %v998 = vpop.permute.xlu0 %997
      %999 = vrot.lane.b32.xlu0 %v714, 28
      %v1000 = vpop.permute.xlu0 %999
      %1001 = vrot.lane.b32.xlu0 %v715, 28
      %v1002 = vpop.permute.xlu0 %1001
      %1003 = vrot.lane.b32.xlu0 %v716, 28
      %v1004 = vpop.permute.xlu0 %1003
      %1005 = vrot.lane.b32.xlu0 %v717, 28
      %v1006 = vpop.permute.xlu0 %1005
      %1007 = vrot.lane.b32.xlu0 %v718, 28
      %v1008 = vpop.permute.xlu0 %1007
      %1009 = vrot.lane.b32.xlu0 %v719, 28
      %v1010 = vpop.permute.xlu0 %1009
      %1011 = vrot.lane.b32.xlu0 %v720, 28
      %v1012 = vpop.permute.xlu0 %1011
      %1013 = vrot.lane.b32.xlu0 %v721, 28
      %v1014 = vpop.permute.xlu0 %1013
      %1015 = vrot.lane.b32.xlu0 %v722, 28
      %v1016 = vpop.permute.xlu0 %1015
      %1017 = vrot.lane.b32.xlu0 %v877, 28
      %v1018 = vpop.permute.xlu0 %1017
      %1019 = vrot.lane.b32.xlu0 %v878, 28
      %v1020 = vpop.permute.xlu0 %1019
      %1021 = vrot.lane.b32.xlu0 %v991, 28
      %v1022 = vpop.permute.xlu0 %1021
      %1023 = vrot.lane.b32.xlu0 %v992, 28
      %v1024 = vpop.permute.xlu0 %1023
      %v1025 = vunpack.c.l.b16 %v616
      %v1026 = vunpack.c.l.b16 %v619
      %v1027 = vunpack.c.l.b16 %v623
      %v1028 = vunpack.c.l.b16 %v626
      %v1029 = vpack.c.b16 %v1026, %v1025
      %v1030 = vpack.c.b16 %v1028, %v1027
      %1031 = vrot.lane.b32.xlu0 %v791, 32
      %v1032 = vpop.permute.xlu0 %1031
      %1033 = vrot.lane.b32.xlu0 %v792, 32
      %v1034 = vpop.permute.xlu0 %1033
      %1035 = vrot.lane.b32.xlu0 %v793, 32
      %v1036 = vpop.permute.xlu0 %1035
      %1037 = vrot.lane.b32.xlu0 %v794, 32
      %v1038 = vpop.permute.xlu0 %1037
      %1039 = vrot.lane.b32.xlu0 %v795, 32
      %v1040 = vpop.permute.xlu0 %1039
      %1041 = vrot.lane.b32.xlu0 %v796, 32
      %v1042 = vpop.permute.xlu0 %1041
      %1043 = vrot.lane.b32.xlu0 %v797, 32
      %v1044 = vpop.permute.xlu0 %1043
      %1045 = vrot.lane.b32.xlu0 %v798, 32
      %v1046 = vpop.permute.xlu0 %1045
      %1047 = vrot.lane.b32.xlu0 %v799, 32
      %v1048 = vpop.permute.xlu0 %1047
      %1049 = vrot.lane.b32.xlu0 %v800, 32
      %v1050 = vpop.permute.xlu0 %1049
      %1051 = vrot.lane.b32.xlu0 %v801, 32
      %v1052 = vpop.permute.xlu0 %1051
      %1053 = vrot.lane.b32.xlu0 %v802, 32
      %v1054 = vpop.permute.xlu0 %1053
      %1055 = vrot.lane.b32.xlu0 %v915, 32
      %v1056 = vpop.permute.xlu0 %1055
      %1057 = vrot.lane.b32.xlu0 %v916, 32
      %v1058 = vpop.permute.xlu0 %1057
      %1059 = vrot.lane.b32.xlu0 %v1029, 32
      %v1060 = vpop.permute.xlu0 %1059
      %1061 = vrot.lane.b32.xlu0 %v1030, 32
      %v1062 = vpop.permute.xlu0 %1061
      %vm1063 = vcmask 31744
      %v1066 = vsel %vm1063, %v659, %v724
      %v1069 = vsel %vm1063, %v660, %v726
      %v1072 = vsel %vm1063, %v661, %v728
      %v1075 = vsel %vm1063, %v662, %v730
      %v1078 = vsel %vm1063, %v663, %v732
      %v1081 = vsel %vm1063, %v664, %v734
      %v1084 = vsel %vm1063, %v665, %v736
      %v1087 = vsel %vm1063, %v666, %v738
      %v1090 = vsel %vm1063, %v667, %v740
      %v1093 = vsel %vm1063, %v668, %v742
      %v1096 = vsel %vm1063, %v669, %v744
      %v1099 = vsel %vm1063, %v670, %v746
      %v1102 = vsel %vm1063, %v671, %v748
      %v1105 = vsel %vm1063, %v672, %v750
      %v1108 = vsel %vm1063, %v673, %v752
      %v1111 = vsel %vm1063, %v674, %v754
      %vm1112 = vcmask 64512
      %v1114 = vsel %vm1112, %v1066, %v804
      %v1116 = vsel %vm1112, %v1069, %v806
      %v1118 = vsel %vm1112, %v1072, %v808
      %v1120 = vsel %vm1112, %v1075, %v810
      %v1122 = vsel %vm1112, %v1078, %v812
      %v1124 = vsel %vm1112, %v1081, %v814
      %v1126 = vsel %vm1112, %v1084, %v816
      %v1128 = vsel %vm1112, %v1087, %v818
      %v1130 = vsel %vm1112, %v1090, %v820
      %v1132 = vsel %vm1112, %v1093, %v822
      %v1134 = vsel %vm1112, %v1096, %v824
      %v1136 = vsel %vm1112, %v1099, %v826
      %v1138 = vsel %vm1112, %v1102, %v828
      %v1140 = vsel %vm1112, %v1105, %v830
      %v1142 = vsel %vm1112, %v1108, %v832
      %v1144 = vsel %vm1112, %v1111, %v834
      %vm1145 = vcmask 97280
      %v1147 = vsel %vm1145, %v1114, %v842
      %v1149 = vsel %vm1145, %v1116, %v844
      %v1151 = vsel %vm1145, %v1118, %v846
      %v1153 = vsel %vm1145, %v1120, %v848
      %v1155 = vsel %vm1145, %v1122, %v850
      %v1157 = vsel %vm1145, %v1124, %v852
      %v1159 = vsel %vm1145, %v1126, %v854
      %v1161 = vsel %vm1145, %v1128, %v856
      %v1163 = vsel %vm1145, %v1130, %v858
      %v1165 = vsel %vm1145, %v1132, %v860
      %v1167 = vsel %vm1145, %v1134, %v862
      %v1169 = vsel %vm1145, %v1136, %v864
      %v1171 = vsel %vm1145, %v1138, %v866
      %v1173 = vsel %vm1145, %v1140, %v868
      %v1175 = vsel %vm1145, %v1142, %v870
      %v1177 = vsel %vm1145, %v1144, %v872
      %vm1178 = vcmask 130048
      %v1180 = vsel %vm1178, %v1147, %v880
      %v1182 = vsel %vm1178, %v1149, %v882
      %v1184 = vsel %vm1178, %v1151, %v884
      %v1186 = vsel %vm1178, %v1153, %v886
      %v1188 = vsel %vm1178, %v1155, %v888
      %v1190 = vsel %vm1178, %v1157, %v890
      %v1192 = vsel %vm1178, %v1159, %v892
      %v1194 = vsel %vm1178, %v1161, %v894
      %v1196 = vsel %vm1178, %v1163, %v896
      %v1198 = vsel %vm1178, %v1165, %v898
      %v1200 = vsel %vm1178, %v1167, %v900
      %v1202 = vsel %vm1178, %v1169, %v902
      %v1204 = vsel %vm1178, %v1171, %v904
      %v1206 = vsel %vm1178, %v1173, %v906
      %v1208 = vsel %vm1178, %v1175, %v908
      %v1210 = vsel %vm1178, %v1177, %v910
      %vm1211 = vcmask 162816
      %v1213 = vsel %vm1211, %v1180, %v918
      %v1215 = vsel %vm1211, %v1182, %v920
      %v1217 = vsel %vm1211, %v1184, %v922
      %v1219 = vsel %vm1211, %v1186, %v924
      %v1221 = vsel %vm1211, %v1188, %v926
      %v1223 = vsel %vm1211, %v1190, %v928
      %v1225 = vsel %vm1211, %v1192, %v930
      %v1227 = vsel %vm1211, %v1194, %v932
      %v1229 = vsel %vm1211, %v1196, %v934
      %v1231 = vsel %vm1211, %v1198, %v936
      %v1233 = vsel %vm1211, %v1200, %v938
      %v1235 = vsel %vm1211, %v1202, %v940
      %v1237 = vsel %vm1211, %v1204, %v942
      %v1239 = vsel %vm1211, %v1206, %v944
      %v1241 = vsel %vm1211, %v1208, %v946
      %v1243 = vsel %vm1211, %v1210, %v948
      %vm1244 = vcmask 195584
      %v1246 = vsel %vm1244, %v1213, %v956
      %v1248 = vsel %vm1244, %v1215, %v958
      %v1250 = vsel %vm1244, %v1217, %v960
      %v1252 = vsel %vm1244, %v1219, %v962
      %v1254 = vsel %vm1244, %v1221, %v964
      %v1256 = vsel %vm1244, %v1223, %v966
      %v1258 = vsel %vm1244, %v1225, %v968
      %v1260 = vsel %vm1244, %v1227, %v970
      %v1262 = vsel %vm1244, %v1229, %v972
      %v1264 = vsel %vm1244, %v1231, %v974
      %v1266 = vsel %vm1244, %v1233, %v976
      %v1268 = vsel %vm1244, %v1235, %v978
      %v1270 = vsel %vm1244, %v1237, %v980
      %v1272 = vsel %vm1244, %v1239, %v982
      %v1274 = vsel %vm1244, %v1241, %v984
      %v1276 = vsel %vm1244, %v1243, %v986
      %vm1277 = vcmask 228352
      %v1279 = vsel %vm1277, %v1246, %v994
      %v1281 = vsel %vm1277, %v1248, %v996
      %v1283 = vsel %vm1277, %v1250, %v998
      %v1285 = vsel %vm1277, %v1252, %v1000
      %v1287 = vsel %vm1277, %v1254, %v1002
      %v1289 = vsel %vm1277, %v1256, %v1004
      %v1291 = vsel %vm1277, %v1258, %v1006
      %v1293 = vsel %vm1277, %v1260, %v1008
      %v1295 = vsel %vm1277, %v1262, %v1010
      %v1297 = vsel %vm1277, %v1264, %v1012
      %v1299 = vsel %vm1277, %v1266, %v1014
      %v1301 = vsel %vm1277, %v1268, %v1016
      %v1303 = vsel %vm1277, %v1270, %v1018
      %v1305 = vsel %vm1277, %v1272, %v1020
      %v1307 = vsel %vm1277, %v1274, %v1022
      %v1309 = vsel %vm1277, %v1276, %v1024
      %vm1310 = vcmask 261120
      %v1312 = vsel %vm1310, %v1279, %v1032
      %v1314 = vsel %vm1310, %v1281, %v1034
      %v1316 = vsel %vm1310, %v1283, %v1036
      %v1318 = vsel %vm1310, %v1285, %v1038
      %v1320 = vsel %vm1310, %v1287, %v1040
      %v1322 = vsel %vm1310, %v1289, %v1042
      %v1324 = vsel %vm1310, %v1291, %v1044
      %v1326 = vsel %vm1310, %v1293, %v1046
      %v1328 = vsel %vm1310, %v1295, %v1048
      %v1330 = vsel %vm1310, %v1297, %v1050
      %v1332 = vsel %vm1310, %v1299, %v1052
      %v1334 = vsel %vm1310, %v1301, %v1054
      %v1336 = vsel %vm1310, %v1303, %v1056
      %v1338 = vsel %vm1310, %v1305, %v1058
      %v1340 = vsel %vm1310, %v1307, %v1060
      %v1342 = vsel %vm1310, %v1309, %v1062
      %v1348 = vunpack.c.l.b16 %v276
      %v1349 = vunpack.c.l.b16 %v277
      %v1350 = vunpack.c.l.b16 %v278
      %v1351 = vunpack.c.l.b16 %v279
      %v1352 = vunpack.c.l.b16 %v280
      %v1353 = vpack.c.b16 %v1349, %v1348
      %v1354 = vpack.c.b16 %v1351, %v1350
      %v1355 = vpack.c.b16 %v1352, %v1352
      %vm1358 = vcmask 293888
      %v1359 = vsel %vm1358, %v1312, 0
      %v1361 = vsel %vm1358, %v1314, 0
      %v1363 = vsel %vm1358, %v1316, 0
      %v1365 = vsel %vm1358, %v1318, 0
      %v1367 = vsel %vm1358, %v1320, 0
      %v1369 = vsel %vm1358, %v1322, 0
      %v1371 = vsel %vm1358, %v1324, 0
      %v1373 = vsel %vm1358, %v1326, 0
      %v1375 = vsel %vm1358, %v1328, 0
      %v1377 = vsel %vm1358, %v1330, 0
      %v1379 = vsel %vm1358, %v1332, 0
      %v1381 = vsel %vm1358, %v1334, 0
      %v1383 = vsel %vm1358, %v1336, 0
      %v1385 = vsel %vm1358, %v1338, 0
      %v1387 = vsel %vm1358, %v1340, 0
      %v1389 = vsel %vm1358, %v1342, 0
      %vm1391 = vcmask 1041408
      %v1393 = vsel %vm1391, %v1355, 0
      %1395 = vmatprep.subr.bf16.mxu0 0
      %1396 = vmatpush1.bf16.msra.mxu0 0
      %1397 = vmatprep.subr.bf16.mxu0 0
      %1398 = vmatpush1.bf16.msra.mxu0 0
      %1399 = vmatprep.subr.bf16.mxu0 0
      %1400 = vmatpush1.bf16.msra.mxu0 0
      %1401 = vmatprep.subr.bf16.mxu0 0
      %1402 = vmatpush1.bf16.msra.mxu0 0
      %1403 = vmatprep.subr.bf16.mxu0 0
      %1404 = vmatpush1.bf16.msra.mxu0 0
      %1405 = vmatprep.subr.bf16.mxu0 0
      %1406 = vmatpush1.bf16.msra.mxu0 %v1393
      %1407 = vmatprep.subr.bf16.mxu0 0
      %1408 = vmatpush1.bf16.msra.mxu0 %v1354
      %1409 = vmatprep.subr.bf16.mxu0 0
      %1410 = vmatpush1.bf16.msra.mxu0 %v1353
      %1411 = vmatprep.subr.bf16.mxu0 0
      %1412 = vmatpush2.bf16.msra.mxu0 0
      %1413 = vmatprep.subr.bf16.mxu0 0
      %1414 = vmatpush2.bf16.msra.mxu0 0
      %1415 = vmatprep.subr.bf16.mxu0 0
      %1416 = vmatpush2.bf16.msra.mxu0 0
      %1417 = vmatprep.subr.bf16.mxu0 0
      %1418 = vmatpush2.bf16.msra.mxu0 0
      %1419 = vmatprep.subr.bf16.mxu0 0
      %1420 = vmatpush2.bf16.msra.mxu0 0
      %1421 = vmatprep.subr.bf16.mxu0 0
      %1422 = vmatpush2.bf16.msra.mxu0 0
      %1423 = vmatprep.subr.bf16.mxu0 0
      %1424 = vmatpush2.bf16.msra.mxu0 0
      %1425 = vmatprep.subr.bf16.mxu0 0
      %1426 = vmatpush2.bf16.msra.mxu0 0
      %1427 = vmatprep.mubr.bf16.mxu0 0
      %1428 = vmatmul.mubr.bf16.gmra.mxu0 %v1359
      %v1429 = vpop.f32.mrf.mxu0
      %v1430 = vadd.f32 0.0, %v1429
      %v1431 = vpop.f32.mrf.mxu0
      %v1432 = vpop.f32.mrf.mxu0
      %v1433 = vadd.f32 0.0, %v1432
      %v1434 = vpop.f32.mrf.mxu0
      %1435 = vmatprep.mubr.bf16.mxu0 0
      %1436 = vmatmul.mubr.bf16.gmra.mxu0 %v1361
      %v1437 = vpop.f32.mrf.mxu0
      %v1438 = vadd.f32 0.0, %v1437
      %v1439 = vpop.f32.mrf.mxu0
      %v1440 = vpop.f32.mrf.mxu0
      %v1441 = vadd.f32 0.0, %v1440
      %v1442 = vpop.f32.mrf.mxu0
      %1443 = vmatprep.mubr.bf16.mxu0 0
      %1444 = vmatmul.mubr.bf16.gmra.mxu0 %v1363
      %v1445 = vpop.f32.mrf.mxu0
      %v1446 = vadd.f32 0.0, %v1445
      %v1447 = vpop.f32.mrf.mxu0
      %v1448 = vpop.f32.mrf.mxu0
      %v1449 = vadd.f32 0.0, %v1448
      %v1450 = vpop.f32.mrf.mxu0
      %1451 = vmatprep.mubr.bf16.mxu0 0
      %1452 = vmatmul.mubr.bf16.gmra.mxu0 %v1365
      %v1453 = vpop.f32.mrf.mxu0
      %v1454 = vadd.f32 0.0, %v1453
      %v1455 = vpop.f32.mrf.mxu0
      %v1456 = vpop.f32.mrf.mxu0
      %v1457 = vadd.f32 0.0, %v1456
      %v1458 = vpop.f32.mrf.mxu0
      %1459 = vmatprep.mubr.bf16.mxu0 0
      %1460 = vmatmul.mubr.bf16.gmra.mxu0 %v1367
      %v1461 = vpop.f32.mrf.mxu0
      %v1462 = vadd.f32 0.0, %v1461
      %v1463 = vpop.f32.mrf.mxu0
      %v1464 = vpop.f32.mrf.mxu0
      %v1465 = vadd.f32 0.0, %v1464
      %v1466 = vpop.f32.mrf.mxu0
      %1467 = vmatprep.mubr.bf16.mxu0 0
      %1468 = vmatmul.mubr.bf16.gmra.mxu0 %v1369
      %v1469 = vpop.f32.mrf.mxu0
      %v1470 = vadd.f32 0.0, %v1469
      %v1471 = vpop.f32.mrf.mxu0
      %v1472 = vpop.f32.mrf.mxu0
      %v1473 = vadd.f32 0.0, %v1472
      %v1474 = vpop.f32.mrf.mxu0
      %1475 = vmatprep.mubr.bf16.mxu0 0
      %1476 = vmatmul.mubr.bf16.gmra.mxu0 %v1371
      %v1477 = vpop.f32.mrf.mxu0
      %v1478 = vadd.f32 0.0, %v1477
      %v1479 = vpop.f32.mrf.mxu0
      %v1480 = vpop.f32.mrf.mxu0
      %v1481 = vadd.f32 0.0, %v1480
      %v1482 = vpop.f32.mrf.mxu0
      %1483 = vmatprep.mubr.bf16.mxu0 0
      %1484 = vmatmul.mubr.bf16.gmra.mxu0 %v1373
      %v1485 = vpop.f32.mrf.mxu0
      %v1486 = vadd.f32 0.0, %v1485
      %v1487 = vpop.f32.mrf.mxu0
      %v1488 = vpop.f32.mrf.mxu0
      %v1489 = vadd.f32 0.0, %v1488
      %v1490 = vpop.f32.mrf.mxu0
      %1491 = vmatprep.mubr.bf16.mxu0 0
      %1492 = vmatmul.mubr.bf16.gmra.mxu0 %v1375
      %v1493 = vpop.f32.mrf.mxu0
      %v1494 = vadd.f32 0.0, %v1493
      %v1495 = vpop.f32.mrf.mxu0
      %v1496 = vpop.f32.mrf.mxu0
      %v1497 = vadd.f32 0.0, %v1496
      %v1498 = vpop.f32.mrf.mxu0
      %1499 = vmatprep.mubr.bf16.mxu0 0
      %1500 = vmatmul.mubr.bf16.gmra.mxu0 %v1377
      %v1501 = vpop.f32.mrf.mxu0
      %v1502 = vadd.f32 0.0, %v1501
      %v1503 = vpop.f32.mrf.mxu0
      %v1504 = vpop.f32.mrf.mxu0
      %v1505 = vadd.f32 0.0, %v1504
      %v1506 = vpop.f32.mrf.mxu0
      %1507 = vmatprep.mubr.bf16.mxu0 0
      %1508 = vmatmul.mubr.bf16.gmra.mxu0 %v1379
      %v1509 = vpop.f32.mrf.mxu0
      %v1510 = vadd.f32 0.0, %v1509
      %v1511 = vpop.f32.mrf.mxu0
      %v1512 = vpop.f32.mrf.mxu0
      %v1513 = vadd.f32 0.0, %v1512
      %v1514 = vpop.f32.mrf.mxu0
      %1515 = vmatprep.mubr.bf16.mxu0 0
      %1516 = vmatmul.mubr.bf16.gmra.mxu0 %v1381
      %v1517 = vpop.f32.mrf.mxu0
      %v1518 = vadd.f32 0.0, %v1517
      %v1519 = vpop.f32.mrf.mxu0
      %v1520 = vpop.f32.mrf.mxu0
      %v1521 = vadd.f32 0.0, %v1520
      %v1522 = vpop.f32.mrf.mxu0
      %1523 = vmatprep.mubr.bf16.mxu0 0
      %1524 = vmatmul.mubr.bf16.gmra.mxu0 %v1383
      %v1525 = vpop.f32.mrf.mxu0
      %v1526 = vadd.f32 0.0, %v1525
      %v1527 = vpop.f32.mrf.mxu0
      %v1528 = vpop.f32.mrf.mxu0
      %v1529 = vadd.f32 0.0, %v1528
      %v1530 = vpop.f32.mrf.mxu0
      %1531 = vmatprep.mubr.bf16.mxu0 0
      %1532 = vmatmul.mubr.bf16.gmra.mxu0 %v1385
      %v1533 = vpop.f32.mrf.mxu0
      %v1534 = vadd.f32 0.0, %v1533
      %v1535 = vpop.f32.mrf.mxu0
      %v1536 = vpop.f32.mrf.mxu0
      %v1537 = vadd.f32 0.0, %v1536
      %v1538 = vpop.f32.mrf.mxu0
      %1539 = vmatprep.mubr.bf16.mxu0 0
      %1540 = vmatmul.mubr.bf16.gmra.mxu0 %v1387
      %v1541 = vpop.f32.mrf.mxu0
      %v1542 = vadd.f32 0.0, %v1541
      %v1543 = vpop.f32.mrf.mxu0
      %v1544 = vpop.f32.mrf.mxu0
      %v1545 = vadd.f32 0.0, %v1544
      %v1546 = vpop.f32.mrf.mxu0
      %1547 = vmatprep.mubr.bf16.mxu0 0
      %1548 = vmatmul.mubr.bf16.gmra.mxu0 %v1389
      %v1549 = vpop.f32.mrf.mxu0
      %v1550 = vadd.f32 0.0, %v1549
      %v1551 = vpop.f32.mrf.mxu0
      %v1552 = vpop.f32.mrf.mxu0
      %v1553 = vadd.f32 0.0, %v1552
      %v1554 = vpop.f32.mrf.mxu0
      %1555 = vdwg.mxu0
      %1556 = vst.msk [vmem:[%s208] sm:$0xff] %vm1112, %v1430
      %1557 = vst.msk [vmem:[%s208 + $0x8] sm:$0xff] %vm1112, %v1433
      %1558 = vst.msk [vmem:[%s208 + $0x10] sm:$0xff] %vm1112, %v1438
      %1559 = vst.msk [vmem:[%s208 + $0x18] sm:$0xff] %vm1112, %v1441
      %1560 = vst.msk [vmem:[%s208 + $0x20] sm:$0xff] %vm1112, %v1446
      %1561 = vst.msk [vmem:[%s208 + $0x28] sm:$0xff] %vm1112, %v1449
      %1562 = vst.msk [vmem:[%s208 + $0x30] sm:$0xff] %vm1112, %v1454
      %1563 = vst.msk [vmem:[%s208 + $0x38] sm:$0xff] %vm1112, %v1457
      %1564 = vst.msk [vmem:[%s208 + $0x40] sm:$0xff] %vm1112, %v1462
      %1565 = vst.msk [vmem:[%s208 + $0x48] sm:$0xff] %vm1112, %v1465
      %1566 = vst.msk [vmem:[%s208 + $0x50] sm:$0xff] %vm1112, %v1470
      %1567 = vst.msk [vmem:[%s208 + $0x58] sm:$0xff] %vm1112, %v1473
      %1568 = vst.msk [vmem:[%s208 + $0x60] sm:$0xff] %vm1112, %v1478
      %1569 = vst.msk [vmem:[%s208 + $0x68] sm:$0xff] %vm1112, %v1481
      %1570 = vst.msk [vmem:[%s208 + $0x70] sm:$0xff] %vm1112, %v1486
      %1571 = vst.msk [vmem:[%s208 + $0x78] sm:$0xff] %vm1112, %v1489
      %1572 = vst.msk [vmem:[%s208 + $0x80] sm:$0xff] %vm1112, %v1494
      %1573 = vst.msk [vmem:[%s208 + $0x88] sm:$0xff] %vm1112, %v1497
      %1574 = vst.msk [vmem:[%s208 + $0x90] sm:$0xff] %vm1112, %v1502
      %1575 = vst.msk [vmem:[%s208 + $0x98] sm:$0xff] %vm1112, %v1505
      %1576 = vst.msk [vmem:[%s208 + $0xa0] sm:$0xff] %vm1112, %v1510
      %1577 = vst.msk [vmem:[%s208 + $0xa8] sm:$0xff] %vm1112, %v1513
      %1578 = vst.msk [vmem:[%s208 + $0xb0] sm:$0xff] %vm1112, %v1518
      %1579 = vst.msk [vmem:[%s208 + $0xb8] sm:$0xff] %vm1112, %v1521
      %1580 = vst.msk [vmem:[%s208 + $0xc0] sm:$0xff] %vm1112, %v1526
      %1581 = vst.msk [vmem:[%s208 + $0xc8] sm:$0xff] %vm1112, %v1529
      %1582 = vst.msk [vmem:[%s208 + $0xd0] sm:$0xff] %vm1112, %v1534
      %1583 = vst.msk [vmem:[%s208 + $0xd8] sm:$0xff] %vm1112, %v1537
      %1584 = vst.msk [vmem:[%s208 + $0xe0] sm:$0xff] %vm1112, %v1542
      %1585 = vst.msk [vmem:[%s208 + $0xe8] sm:$0xff] %vm1112, %v1545
      %1586 = vst.msk [vmem:[%s208 + $0xf0] sm:$0xff] %vm1112, %v1550
      %1587 = vst.msk [vmem:[%s208 + $0xf8] sm:$0xff] %vm1112, %v1553
      %v1588 = vsel %vm1112, %v1430, 0.0
      %v1589 = vsel %vm1112, %v1433, 0.0
      %v1590 = vadd.f32 %v1588, %v1589
      %v1591 = vsel %vm1112, %v1438, 0.0
      %v1592 = vadd.f32 %v1590, %v1591
      %v1593 = vsel %vm1112, %v1441, 0.0
      %v1594 = vadd.f32 %v1592, %v1593
      %v1595 = vsel %vm1112, %v1446, 0.0
      %v1596 = vadd.f32 %v1594, %v1595
      %v1597 = vsel %vm1112, %v1449, 0.0
      %v1598 = vadd.f32 %v1596, %v1597
      %v1599 = vsel %vm1112, %v1454, 0.0
      %v1600 = vadd.f32 %v1598, %v1599
      %v1601 = vsel %vm1112, %v1457, 0.0
      %v1602 = vadd.f32 %v1600, %v1601
      %v1603 = vsel %vm1112, %v1462, 0.0
      %v1604 = vadd.f32 %v1602, %v1603
      %v1605 = vsel %vm1112, %v1465, 0.0
      %v1606 = vadd.f32 %v1604, %v1605
      %v1607 = vsel %vm1112, %v1470, 0.0
      %v1608 = vadd.f32 %v1606, %v1607
      %v1609 = vsel %vm1112, %v1473, 0.0
      %v1610 = vadd.f32 %v1608, %v1609
      %v1611 = vsel %vm1112, %v1478, 0.0
      %v1612 = vadd.f32 %v1610, %v1611
      %v1613 = vsel %vm1112, %v1481, 0.0
      %v1614 = vadd.f32 %v1612, %v1613
      %v1615 = vsel %vm1112, %v1486, 0.0
      %v1616 = vadd.f32 %v1614, %v1615
      %v1617 = vsel %vm1112, %v1489, 0.0
      %v1618 = vadd.f32 %v1616, %v1617
      %v1619 = vsel %vm1112, %v1494, 0.0
      %v1620 = vadd.f32 %v1618, %v1619
      %v1621 = vsel %vm1112, %v1497, 0.0
      %v1622 = vadd.f32 %v1620, %v1621
      %v1623 = vsel %vm1112, %v1502, 0.0
      %v1624 = vadd.f32 %v1622, %v1623
      %v1625 = vsel %vm1112, %v1505, 0.0
      %v1626 = vadd.f32 %v1624, %v1625
      %v1627 = vsel %vm1112, %v1510, 0.0
      %v1628 = vadd.f32 %v1626, %v1627
      %v1629 = vsel %vm1112, %v1513, 0.0
      %v1630 = vadd.f32 %v1628, %v1629
      %v1631 = vsel %vm1112, %v1518, 0.0
      %v1632 = vadd.f32 %v1630, %v1631
      %v1633 = vsel %vm1112, %v1521, 0.0
      %v1634 = vadd.f32 %v1632, %v1633
      %v1635 = vsel %vm1112, %v1526, 0.0
      %v1636 = vadd.f32 %v1634, %v1635
      %v1637 = vsel %vm1112, %v1529, 0.0
      %v1638 = vadd.f32 %v1636, %v1637
      %v1639 = vsel %vm1112, %v1534, 0.0
      %v1640 = vadd.f32 %v1638, %v1639
      %v1641 = vsel %vm1112, %v1537, 0.0
      %v1642 = vadd.f32 %v1640, %v1641
      %v1643 = vsel %vm1112, %v1542, 0.0
      %v1644 = vadd.f32 %v1642, %v1643
      %v1645 = vsel %vm1112, %v1545, 0.0
      %v1646 = vadd.f32 %v1644, %v1645
      %v1647 = vsel %vm1112, %v1550, 0.0
      %v1648 = vadd.f32 %v1646, %v1647
      %v1649 = vsel %vm1112, %v1553, 0.0
      %v1650 = vadd.f32 %v1648, %v1649
      %v1651 = vrot.slane %v1650, 4
      %v1652 = vadd.f32 %v1650, %v1651
      %v1653 = vrot.slane %v1652, 2
      %v1654 = vadd.f32 %v1652, %v1653
      %v1655 = vrot.slane %v1654, 1
      %v1656 = vadd.f32 %v1654, %v1655
      %vm1657 = vcmask 57344
      %1658 = vst.msk [vmem:[%s211] sm:$0x1] %vm1657, %v1656
      %v1659 = vmul.f32 %v1430, %v1430
      %v1660 = vmul.f32 %v1433, %v1433
      %v1661 = vmul.f32 %v1438, %v1438
      %v1662 = vmul.f32 %v1441, %v1441
      %v1663 = vmul.f32 %v1446, %v1446
      %v1664 = vmul.f32 %v1449, %v1449
      %v1665 = vmul.f32 %v1454, %v1454
      %v1666 = vmul.f32 %v1457, %v1457
      %v1667 = vmul.f32 %v1462, %v1462
      %v1668 = vmul.f32 %v1465, %v1465
      %v1669 = vmul.f32 %v1470, %v1470
      %v1670 = vmul.f32 %v1473, %v1473
      %v1671 = vmul.f32 %v1478, %v1478
      %v1672 = vmul.f32 %v1481, %v1481
      %v1673 = vmul.f32 %v1486, %v1486
      %v1674 = vmul.f32 %v1489, %v1489
      %v1675 = vmul.f32 %v1494, %v1494
      %v1676 = vmul.f32 %v1497, %v1497
      %v1677 = vmul.f32 %v1502, %v1502
      %v1678 = vmul.f32 %v1505, %v1505
      %v1679 = vmul.f32 %v1510, %v1510
      %v1680 = vmul.f32 %v1513, %v1513
      %v1681 = vmul.f32 %v1518, %v1518
      %v1682 = vmul.f32 %v1521, %v1521
      %v1683 = vmul.f32 %v1526, %v1526
      %v1684 = vmul.f32 %v1529, %v1529
      %v1685 = vmul.f32 %v1534, %v1534
      %v1686 = vmul.f32 %v1537, %v1537
      %v1687 = vmul.f32 %v1542, %v1542
      %v1688 = vmul.f32 %v1545, %v1545
      %v1689 = vmul.f32 %v1550, %v1550
      %v1690 = vmul.f32 %v1553, %v1553
      %v1691 = vsel %vm1112, %v1659, 0.0
      %v1692 = vsel %vm1112, %v1660, 0.0
      %v1693 = vadd.f32 %v1691, %v1692
      %v1694 = vsel %vm1112, %v1661, 0.0
      %v1695 = vadd.f32 %v1693, %v1694
      %v1696 = vsel %vm1112, %v1662, 0.0
      %v1697 = vadd.f32 %v1695, %v1696
      %v1698 = vsel %vm1112, %v1663, 0.0
      %v1699 = vadd.f32 %v1697, %v1698
      %v1700 = vsel %vm1112, %v1664, 0.0
      %v1701 = vadd.f32 %v1699, %v1700
      %v1702 = vsel %vm1112, %v1665, 0.0
      %v1703 = vadd.f32 %v1701, %v1702
      %v1704 = vsel %vm1112, %v1666, 0.0
      %v1705 = vadd.f32 %v1703, %v1704
      %v1706 = vsel %vm1112, %v1667, 0.0
      %v1707 = vadd.f32 %v1705, %v1706
      %v1708 = vsel %vm1112, %v1668, 0.0
      %v1709 = vadd.f32 %v1707, %v1708
      %v1710 = vsel %vm1112, %v1669, 0.0
      %v1711 = vadd.f32 %v1709, %v1710
      %v1712 = vsel %vm1112, %v1670, 0.0
      %v1713 = vadd.f32 %v1711, %v1712
      %v1714 = vsel %vm1112, %v1671, 0.0
      %v1715 = vadd.f32 %v1713, %v1714
      %v1716 = vsel %vm1112, %v1672, 0.0
      %v1717 = vadd.f32 %v1715, %v1716
      %v1718 = vsel %vm1112, %v1673, 0.0
      %v1719 = vadd.f32 %v1717, %v1718
      %v1720 = vsel %vm1112, %v1674, 0.0
      %v1721 = vadd.f32 %v1719, %v1720
      %v1722 = vsel %vm1112, %v1675, 0.0
      %v1723 = vadd.f32 %v1721, %v1722
      %v1724 = vsel %vm1112, %v1676, 0.0
      %v1725 = vadd.f32 %v1723, %v1724
      %v1726 = vsel %vm1112, %v1677, 0.0
      %v1727 = vadd.f32 %v1725, %v1726
      %v1728 = vsel %vm1112, %v1678, 0.0
      %v1729 = vadd.f32 %v1727, %v1728
      %v1730 = vsel %vm1112, %v1679, 0.0
      %v1731 = vadd.f32 %v1729, %v1730
      %v1732 = vsel %vm1112, %v1680, 0.0
      %v1733 = vadd.f32 %v1731, %v1732
      %v1734 = vsel %vm1112, %v1681, 0.0
      %v1735 = vadd.f32 %v1733, %v1734
      %v1736 = vsel %vm1112, %v1682, 0.0
      %v1737 = vadd.f32 %v1735, %v1736
      %v1738 = vsel %vm1112, %v1683, 0.0
      %v1739 = vadd.f32 %v1737, %v1738
      %v1740 = vsel %vm1112, %v1684, 0.0
      %v1741 = vadd.f32 %v1739, %v1740
      %v1742 = vsel %vm1112, %v1685, 0.0
      %v1743 = vadd.f32 %v1741, %v1742
      %v1744 = vsel %vm1112, %v1686, 0.0
      %v1745 = vadd.f32 %v1743, %v1744
      %v1746 = vsel %vm1112, %v1687, 0.0
      %v1747 = vadd.f32 %v1745, %v1746
      %v1748 = vsel %vm1112, %v1688, 0.0
      %v1749 = vadd.f32 %v1747, %v1748
      %v1750 = vsel %vm1112, %v1689, 0.0
      %v1751 = vadd.f32 %v1749, %v1750
      %v1752 = vsel %vm1112, %v1690, 0.0
      %v1753 = vadd.f32 %v1751, %v1752
      %v1754 = vrot.slane %v1753, 4
      %v1755 = vadd.f32 %v1753, %v1754
      %v1756 = vrot.slane %v1755, 2
      %v1757 = vadd.f32 %v1755, %v1756
      %v1758 = vrot.slane %v1757, 1
      %v1759 = vadd.f32 %v1757, %v1758
      %1760 = vst.msk [vmem:[%s214] sm:$0x1] %vm1657, %v1759
      %p1761 = scmp.lt.s32.totalorder %s16, 1
      %s1762 = scalar_select %p1761, %s16, 1
      %s1763 = smul.addr %s1762, 32
      %s1764 = smul.addr %s1763, 8
      %s1765 = scalar_lea.vmem %s2, %s1764
      %p1766 = scmp.lt.s32.totalorder %s16, 1
      %s1767 = scalar_select %p1766, %s16, 1
      %s1768 = scalar_lea.vmem %s3, %s1767
      %p1769 = scmp.lt.s32.totalorder %s16, 1
      %s1770 = scalar_select %p1769, %s16, 1
      %s1771 = scalar_lea.vmem %s4, %s1770
      // Predicated region
      $region29: #{aspp_module_forward.2} parent=27 // pred_check
        %p1772 = pneg %p81
      $region30: #{aspp_module_forward.2} parent=27 // pred_check_branch
        %1774 = sbr.rel (%p1772) target = $region32
      $region31: #{aspp_module_forward.2} parent=27 // pred_region
        _
      $region32: #{aspp_module_forward.2} parent=27 // pred_fallthru
        _
      // Predicated region
      $region33: #{aspp_module_forward.2} parent=27 // pred_check
        %p1775 = pneg %p107
      $region34: #{aspp_module_forward.2} parent=27 // pred_check_branch
        %1777 = sbr.rel (%p1775) target = $region36
      $region35: #{aspp_module_forward.2} parent=27 // pred_region
        _
      $region36: #{aspp_module_forward.2} parent=27 // pred_fallthru
        _
      // Predicated region
      $region37: #{aspp_module_forward.2} parent=27 // pred_check
        %p1778 = pneg %p133
      $region38: #{aspp_module_forward.2} parent=27 // pred_check_branch
        %1780 = sbr.rel (%p1778) target = $region40
      $region39: #{aspp_module_forward.2} parent=27 // pred_region
        _
      $region40: #{aspp_module_forward.2} parent=27 // pred_fallthru
        _
    $region28: #{aspp_module_forward.2} parent=5 // pred_fallthru
      _
    %p1781 = scmp.le.s32.totalorder 2, %s11
    // Predicated region
    $region41: #{aspp_module_forward.2} parent=5 // pred_check
      %p1782 = pneg %p1781
    $region42: #{aspp_module_forward.2} parent=5 // pred_check_branch
      %1784 = sbr.rel (%p1782) target = $region44
    $region43: #{aspp_module_forward.2} parent=5 // pred_region
      %s1785 = ssub.s32 %s11, 2
      // Predicated region
      $region45: #{aspp_module_forward.2} parent=43 // pred_check
        %p1786 = pneg %p87
      $region46: #{aspp_module_forward.2} parent=43 // pred_check_branch
        %1788 = sbr.rel (%p1786) target = $region48
      $region47: #{aspp_module_forward.2} parent=43 // pred_region
        %p1789 = scmp.lt.s32.totalorder %s17, 1
        %s1790 = scalar_select %p1789, %s17, 1
        %s1791 = smul.addr %s1790, 32
        %s1792 = smul.addr %s1791, 8
        %s1793 = scalar_lea.vmem %s2, %s1792
      $region48: #{aspp_module_forward.2} parent=43 // pred_fallthru
        _
      // Predicated region
      $region49: #{aspp_module_forward.2} parent=43 // pred_check
        %p1794 = pneg %p113
      $region50: #{aspp_module_forward.2} parent=43 // pred_check_branch
        %1796 = sbr.rel (%p1794) target = $region52
      $region51: #{aspp_module_forward.2} parent=43 // pred_region
        %p1797 = scmp.lt.s32.totalorder %s17, 1
        %s1798 = scalar_select %p1797, %s17, 1
        %s1799 = scalar_lea.vmem %s3, %s1798
      $region52: #{aspp_module_forward.2} parent=43 // pred_fallthru
        _
      // Predicated region
      $region53: #{aspp_module_forward.2} parent=43 // pred_check
        %p1800 = pneg %p139
      $region54: #{aspp_module_forward.2} parent=43 // pred_check_branch
        %1802 = sbr.rel (%p1800) target = $region56
      $region55: #{aspp_module_forward.2} parent=43 // pred_region
        %p1803 = scmp.lt.s32.totalorder %s17, 1
        %s1804 = scalar_select %p1803, %s17, 1
        %s1805 = scalar_lea.vmem %s4, %s1804
      $region56: #{aspp_module_forward.2} parent=43 // pred_fallthru
        _
    $region44: #{aspp_module_forward.2} parent=5 // pred_fallthru
      _
  $region6: #{aspp_module_forward.2} parent=0 // loop_footer
    %s15 = sadd.s32 1, %s11
  $region7: #{aspp_module_forward.2} parent=0 // loop_footer_branch
    %10 = sbr.rel target = $region3
  $region8: #{aspp_module_forward.2} parent=0 // loop_exit
    _

</llo_original>
